<compile_context>
chip_gen: v7x
topology: tpu7x:2x2x1
jax: 0.10.0
libtpu: 0.0.40
codegen_flags: <defaults>
</compile_context>

<pallas_src>
import functools

import numpy as np
import jax
import jax.numpy as jnp
from jax.experimental import pallas as pl
from jax.experimental.pallas import tpu as pltpu

NUM_HEADING_BIN = 12
NUM_SIZE_CLUSTER = 8


def get_mean_size_array(num_size_cluster):
    """Deterministic synthetic mean-size table (NS, 3), strictly positive."""
    base = np.array([[3.9, 1.6, 1.56]], dtype=np.float32)
    scale = (1.0 + 0.25 * np.arange(num_size_cluster, dtype=np.float32))[:, None]
    return base * scale


# --------------------------------------------------------------------------
# Per-batch feature layout: features on sublanes, batch on lanes -> (F, B)
# --------------------------------------------------------------------------
def _make_feat_layout(NH, NS):
    off = {}
    cur = 0

    def add(name, width):
        nonlocal cur
        off[name] = (cur, width)
        cur += width

    add('center_label', 3)
    add('center', 3)
    add('stage1_center', 3)
    add('hcl', 1)
    add('hrl', 1)
    add('scl', 1)
    add('srl', 3)
    add('heading_scores', NH)
    add('hrn', NH)
    add('hres', NH)
    add('size_scores', NS)
    add('srn_l', NS)
    add('srn_w', NS)
    add('srn_h', NS)
    add('sres_l', NS)
    add('sres_w', NS)
    add('sres_h', NS)
    F = cur
    F_pad = -(-F // 8) * 8
    return off, F, F_pad


# --------------------------------------------------------------------------
# Pallas kernel (one batch tile per grid step; emits raw partial sums)
# --------------------------------------------------------------------------
def _huber_elem(err, delta):
    a = jnp.abs(err)
    q = jnp.minimum(a, delta)
    return 0.5 * q * q + delta * (a - q)


def _frustum_loss_kernel(feat_ref, ms_ref, logits_ref, mask_ref, out_ref,
                         *, off, B, tile_b, NH, NS):
    f32 = jnp.float32
    pid = pl.program_id(0)

    # validity masks for the (possibly padded) last batch tile
    lane = jax.lax.broadcasted_iota(jnp.int32, (1, tile_b), 1)
    valid_l = ((lane + pid * tile_b) < B).astype(f32)            # (1, tile_b)
    sub = jax.lax.broadcasted_iota(jnp.int32, (tile_b, 1), 0)
    valid_s = ((sub + pid * tile_b) < B).astype(f32)             # (tile_b, 1)

    def rows(name):
        a, w = off[name]
        return feat_ref[a:a + w, :]                              # (w, tile_b)

    # ---- segmentation loss: binary CE as a stable softplus, masked sum ----
    l0 = logits_ref[0].astype(f32)                               # (tile_b, N)
    l1 = logits_ref[1].astype(f32)
    m = mask_ref[...].astype(f32)                                # exactly 0 / 1
    d = (1.0 - 2.0 * m) * (l1 - l0)                              # l_other - l_sel
    seg_ce = jnp.maximum(d, 0.0) + jnp.log(1.0 + jnp.exp(-jnp.abs(d)))
    seg_sum = jnp.sum(seg_ce * valid_s)

    # ---- center huber losses (L1 distance per batch element) ----
    cl = rows('center_label')                                    # (3, tile_b)
    c = rows('center')
    s1 = rows('stage1_center')
    center_dist = jnp.sum(jnp.abs(cl - c), axis=0, keepdims=True)
    center_sum = jnp.sum(_huber_elem(center_dist, 2.0) * valid_l)
    stage1_dist = jnp.sum(jnp.abs(cl - s1), axis=0, keepdims=True)
    stage1_sum = jnp.sum(_huber_elem(stage1_dist, 1.0) * valid_l)

    # ---- heading class CE + normalized residual huber ----
    hcl = rows('hcl')                                            # (1, tile_b)
    hs = rows('heading_scores')                                  # (NH, tile_b)
    h_iota = jax.lax.broadcasted_iota(jnp.int32, (NH, tile_b), 0).astype(f32)
    hc_onehot = (h_iota == hcl).astype(f32)
    hmax = jnp.max(hs, axis=0, keepdims=True)
    hlse = hmax + jnp.log(jnp.sum(jnp.exp(hs - hmax), axis=0, keepdims=True))
    hsel = jnp.sum(hs * hc_onehot, axis=0, keepdims=True)
    hclass_sum = jnp.sum((hlse - hsel) * valid_l)

    hrl = rows('hrl')                                            # (1, tile_b)
    hrn_pred = jnp.sum(rows('hrn') * hc_onehot, axis=0, keepdims=True)
    hres_sum = jnp.sum(_huber_elem(hrn_pred - hrl * (NH / np.pi), 1.0) * valid_l)

    # ---- size class CE + normalized residual huber ----
    scl = rows('scl')
    ss = rows('size_scores')                                     # (NS, tile_b)
    s_iota = jax.lax.broadcasted_iota(jnp.int32, (NS, tile_b), 0).astype(f32)
    sc_onehot = (s_iota == scl).astype(f32)
    smax = jnp.max(ss, axis=0, keepdims=True)
    slse = smax + jnp.log(jnp.sum(jnp.exp(ss - smax), axis=0, keepdims=True))
    ssel = jnp.sum(ss * sc_onehot, axis=0, keepdims=True)
    sclass_sum = jnp.sum((slse - ssel) * valid_l)

    ms = ms_ref[...]                                             # (NS, 3)
    ms_l = ms[:, 0:1]                                            # (NS, 1)
    ms_w = ms[:, 1:2]
    ms_h = ms[:, 2:3]
    msl_l = jnp.sum(sc_onehot * ms_l, axis=0, keepdims=True)     # (1, tile_b)
    msl_w = jnp.sum(sc_onehot * ms_w, axis=0, keepdims=True)
    msl_h = jnp.sum(sc_onehot * ms_h, axis=0, keepdims=True)

    pred_l = jnp.sum(sc_onehot * rows('srn_l'), axis=0, keepdims=True)
    pred_w = jnp.sum(sc_onehot * rows('srn_w'), axis=0, keepdims=True)
    pred_h = jnp.sum(sc_onehot * rows('srn_h'), axis=0, keepdims=True)

    srl = rows('srl')                                            # (3, tile_b)
    lbl_l = srl[0:1, :] / msl_l                                  # exact divide
    lbl_w = srl[1:2, :] / msl_w
    lbl_h = srl[2:3, :] / msl_h
    size_dist = (jnp.abs(lbl_l - pred_l) + jnp.abs(lbl_w - pred_w)
                 + jnp.abs(lbl_h - pred_h))
    sres_sum = jnp.sum(_huber_elem(size_dist, 1.0) * valid_l)

    # ---- corner loss (one-hot selection == masking the full corner grid) ----
    bin_c = h_iota * (2.0 * np.pi / NH)                          # (NH, tile_b)
    heading_pred = jnp.sum(hc_onehot * (rows('hres') + bin_c), axis=0,
                           keepdims=True)
    heading_label = hrl + jnp.sum(hc_onehot * bin_c, axis=0, keepdims=True)

    size_pred_l = jnp.sum(sc_onehot * (ms_l + rows('sres_l')), axis=0,
                          keepdims=True)
    size_pred_w = jnp.sum(sc_onehot * (ms_w + rows('sres_w')), axis=0,
                          keepdims=True)
    size_pred_h = jnp.sum(sc_onehot * (ms_h + rows('sres_h')), axis=0,
                          keepdims=True)
    size_lbl_l = msl_l + srl[0:1, :]
    size_lbl_w = msl_w + srl[1:2, :]
    size_lbl_h = msl_h + srl[2:3, :]

    # corner sign patterns on sublanes (built in-kernel, no constant-table DMA)
    j = jax.lax.broadcasted_iota(jnp.int32, (8, 1), 0)
    j4 = jnp.bitwise_and(j, 3)
    x_sign = jnp.where(j4 < 2, 1.0, -1.0).astype(f32)                 # ++--++--
    y_sign = jnp.where(j < 4, 1.0, -1.0).astype(f32)                  # ++++----
    z_sign = jnp.where(jnp.logical_or(j4 == 0, j4 == 3),
                       1.0, -1.0).astype(f32)                         # +--++--+

    def corners_xyz(cx, cy, cz, heading, ll, ww, hh):
        x = 0.5 * ll * x_sign                                    # (8, tile_b)
        y = 0.5 * hh * y_sign
        z = 0.5 * ww * z_sign
        ch = jnp.cos(heading)                                    # (1, tile_b)
        sh = jnp.sin(heading)
        return ch * x + sh * z + cx, y + cy, -sh * x + ch * z + cz

    px, py, pz = corners_xyz(c[0:1, :], c[1:2, :], c[2:3, :],
                             heading_pred, size_pred_l, size_pred_w, size_pred_h)
    gx, gy, gz = corners_xyz(cl[0:1, :], cl[1:2, :], cl[2:3, :],
                             heading_label, size_lbl_l, size_lbl_w, size_lbl_h)
    fx, fy, fz = corners_xyz(cl[0:1, :], cl[1:2, :], cl[2:3, :],
                             heading_label + np.pi,
                             size_lbl_l, size_lbl_w, size_lbl_h)
    d_gt = jnp.abs(px - gx) + jnp.abs(py - gy) + jnp.abs(pz - gz)     # (8, tile_b)
    d_fl = jnp.abs(px - fx) + jnp.abs(py - fy) + jnp.abs(pz - fz)
    corners_dist = jnp.minimum(d_gt, d_fl)
    corner_sum = jnp.sum(_huber_elem(corners_dist, 1.0) * valid_l)

    # ---- emit this tile's partial sums as an aligned (8, 128) block ----
    slot = jax.lax.broadcasted_iota(jnp.int32, (8, 128), 0)
    res = (jnp.where(slot == 0, seg_sum, 0.0)
           + jnp.where(slot == 1, center_sum, 0.0)
           + jnp.where(slot == 2, stage1_sum, 0.0)
           + jnp.where(slot == 3, hclass_sum, 0.0)
           + jnp.where(slot == 4, hres_sum, 0.0)
           + jnp.where(slot == 5, sclass_sum, 0.0)
           + jnp.where(slot == 6, sres_sum, 0.0)
           + jnp.where(slot == 7, corner_sum, 0.0))
    out_ref[0] = res.astype(out_ref.dtype)


# --------------------------------------------------------------------------
# Wrapper: separate seg-plane inputs + tiny transposed feature block
# --------------------------------------------------------------------------
def frustum_3d_loss(mask_label, center_label, heading_class_label,
                    heading_residual_label, size_class_label,
                    size_residual_label, endpoints, mean_size_arr,
                    *, num_heading_bin=NUM_HEADING_BIN,
                    num_size_cluster=NUM_SIZE_CLUSTER,
                    seg_loss_weight=1.0, box_loss_weight=1.0,
                    corner_loss_weight=10.0, tile_b=None):
    B, N = mask_label.shape
    NH, NS = num_heading_bin, num_size_cluster
    f32 = jnp.float32
    bf16 = jnp.bfloat16

    # ---- batch tiling (single tile when B is small) ----
    if tile_b is None:
        tile_b = B if B <= 256 else 256
    tile_b = int(tile_b)
    if tile_b >= B:
        tile_b = B
        num_tiles = 1
    else:
        # Multi-tile: the tile must be lane-aligned for the (F, B) feature
        # block and sublane-aligned for the (B, N) seg planes.
        tile_b = max(128, (tile_b // 128) * 128)
        num_tiles = -(-B // tile_b)
    b_pad = num_tiles * tile_b

    off, F, F_pad = _make_feat_layout(NH, NS)

    # ---- seg planes: logits as a (2, B, N) bf16 slab, mask as (B, N) bf16 ----
    # mask_label must be integer {0, 1} class indices (as in the torch module).
    logits = jnp.moveaxis(endpoints['mask_logits'].astype(bf16), -1, 0)
    seg_mask = mask_label.astype(bf16)
    if b_pad > B:
        logits = jnp.pad(logits, ((0, 0), (0, b_pad - B), (0, 0)))
        seg_mask = jnp.pad(seg_mask, ((0, b_pad - B), (0, 0)))

    # ---- tiny per-batch feature block, transposed to (F_pad, B) ----
    srn = endpoints['size_residuals_normalized'].astype(f32)     # (B, NS, 3)
    sres = endpoints['size_residuals'].astype(f32)
    feat_pieces = [
        center_label.astype(f32).T,
        endpoints['center'].astype(f32).T,
        endpoints['stage1_center'].astype(f32).T,
        heading_class_label.astype(f32).reshape(1, B),
        heading_residual_label.astype(f32).reshape(1, B),
        size_class_label.astype(f32).reshape(1, B),
        size_residual_label.astype(f32).T,
        endpoints['heading_scores'].astype(f32).T,
        endpoints['heading_residuals_normalized'].astype(f32).T,
        endpoints['heading_residuals'].astype(f32).T,
        endpoints['size_scores'].astype(f32).T,
        srn[:, :, 0].T, srn[:, :, 1].T, srn[:, :, 2].T,
        sres[:, :, 0].T, sres[:, :, 1].T, sres[:, :, 2].T,
    ]
    if F_pad > F:
        feat_pieces.append(jnp.zeros((F_pad - F, B), f32))
    feat = jnp.concatenate(feat_pieces, axis=0)                  # (F_pad, B), tiny
    if b_pad > B:
        feat = jnp.pad(feat, ((0, 0), (0, b_pad - B)))

    ms = jnp.asarray(mean_size_arr, dtype=f32).reshape(NS, 3)

    kernel = functools.partial(
        _frustum_loss_kernel, off=off, B=B, tile_b=tile_b, NH=NH, NS=NS)

    per_tile_bytes = (3 * tile_b * N * 2          # logit + mask planes (bf16)
                      + F_pad * tile_b * 4        # feature block (f32)
                      + NS * 3 * 4 + 8 * 128 * 4)
    vmem_limit = int(min(64 * 2 ** 20, max(32 * 2 ** 20, 4 * per_tile_bytes)))

    cost = pl.CostEstimate(
        flops=int(12 * B * N + 800 * B),
        transcendentals=int(2 * B * N + (NH + NS + 8) * B),
        bytes_accessed=int(3 * b_pad * N * 2 + F_pad * b_pad * 4
                           + num_tiles * (NS * 3 * 4 + 8 * 128 * 4)))

    out = pl.pallas_call(
        kernel,
        out_shape=jax.ShapeDtypeStruct((num_tiles, 8, 128), f32),
        grid=(num_tiles,),
        in_specs=[
            pl.BlockSpec((F_pad, tile_b), lambda i: (0, i)),
            pl.BlockSpec((NS, 3), lambda i: (0, 0)),
            pl.BlockSpec((2, tile_b, N), lambda i: (0, i, 0)),
            pl.BlockSpec((tile_b, N), lambda i: (i, 0)),
        ],
        out_specs=pl.BlockSpec((1, 8, 128), lambda i: (i, 0, 0)),
        compiler_params=pltpu.CompilerParams(
            dimension_semantics=("parallel",),
            vmem_limit_bytes=vmem_limit),
        cost_estimate=cost,
    )(feat, ms, logits, seg_mask)

    # Combine per-tile raw sums (num_tiles x 8 scalars) and normalize.
    partial = jnp.sum(out[:, :, 0], axis=0)
    seg_loss = partial[0] / (B * N)
    center_loss = partial[1] / B
    stage1_center_loss = partial[2] / B
    heading_class_loss = partial[3] / B
    heading_residual_loss = partial[4] / B
    size_class_loss = partial[5] / B
    size_residual_loss = partial[6] / B
    corner_loss = partial[7] / (B * 8)

    total_loss = (seg_loss_weight * seg_loss
                  + box_loss_weight * (center_loss + heading_class_loss
                                       + size_class_loss
                                       + heading_residual_loss * 20.0
                                       + size_residual_loss * 20.0
                                       + stage1_center_loss
                                       + corner_loss_weight * corner_loss))

    losses = {
        'seg_loss': seg_loss, 'center_loss': center_loss,
        'stage1_center_loss': stage1_center_loss,
        'heading_class_loss': heading_class_loss,
        'heading_residual_normalized_loss': heading_residual_loss,
        'size_class_loss': size_class_loss,
        'size_residuals_normalized_loss': size_residual_loss,
        'corner_loss': corner_loss, 'total_loss': total_loss,
    }
    return total_loss, losses


# --------------------------------------------------------------------------
# Pure-JAX reference (mirrors the PyTorch module, incl. full corner grid)
# --------------------------------------------------------------------------
def _huber_ref(err, delta):
    a = jnp.abs(err)
    q = jnp.minimum(a, delta)
    return jnp.mean(0.5 * q * q + delta * (a - q))


def _corners_helper_ref(centers, headings, sizes):
    l, w, h = sizes[:, 0], sizes[:, 1], sizes[:, 2]
    x_c = jnp.stack([l / 2, l / 2, -l / 2, -l / 2, l / 2, l / 2, -l / 2, -l / 2], 1)
    y_c = jnp.stack([h / 2, h / 2, h / 2, h / 2, -h / 2, -h / 2, -h / 2, -h / 2], 1)
    z_c = jnp.stack([w / 2, -w / 2, -w / 2, w / 2, w / 2, -w / 2, -w / 2, w / 2], 1)
    c = jnp.cos(headings)[:, None]
    s = jnp.sin(headings)[:, None]
    xw = c * x_c + s * z_c + centers[:, 0:1]
    yw = y_c + centers[:, 1:2]
    zw = -s * x_c + c * z_c + centers[:, 2:3]
    return jnp.stack([xw, yw, zw], axis=-1)


def reference_loss(mask_label, center_label, heading_class_label,
                   heading_residual_label, size_class_label, size_residual_label,
                   endpoints, mean_size_arr, *, NH, NS, seg_w, box_w, corner_w):
    logp = jax.nn.log_softmax(endpoints['mask_logits'], axis=-1)
    seg_loss = -jnp.mean(jnp.take_along_axis(
        logp, mask_label[..., None].astype(jnp.int32), axis=-1))

    cd = jnp.sum(jnp.abs(center_label - endpoints['center']), axis=-1)
    center_loss = _huber_ref(cd, 2.0)
    s1d = jnp.sum(jnp.abs(center_label - endpoints['stage1_center']), axis=-1)
    stage1_loss = _huber_ref(s1d, 1.0)

    hlp = jax.nn.log_softmax(endpoints['heading_scores'], axis=-1)
    heading_class_loss = -jnp.mean(
        jnp.take_along_axis(hlp, heading_class_label[:, None], axis=-1))
    hc_onehot = jax.nn.one_hot(heading_class_label, NH, dtype=jnp.float32)
    hrn_label = heading_residual_label / (np.pi / NH)
    hrn_loss = _huber_ref(
        jnp.sum(endpoints['heading_residuals_normalized'] * hc_onehot, axis=1)
        - hrn_label, 1.0)

    slp = jax.nn.log_softmax(endpoints['size_scores'], axis=-1)
    size_class_loss = -jnp.mean(
        jnp.take_along_axis(slp, size_class_label[:, None], axis=-1))
    sc_onehot = jax.nn.one_hot(size_class_label, NS, dtype=jnp.float32)
    rep = sc_onehot[:, :, None]
    pred_srn = jnp.sum(endpoints['size_residuals_normalized'] * rep, axis=1)
    mean_size_label = jnp.sum(rep * mean_size_arr[None], axis=1)
    srl_norm = size_residual_label / mean_size_label
    size_res_loss = _huber_ref(jnp.sum(jnp.abs(srl_norm - pred_srn), axis=-1), 1.0)

    B = center_label.shape[0]
    bin_centers = jnp.arange(NH, dtype=jnp.float32) * (2 * np.pi / NH)
    headings = endpoints['heading_residuals'] + bin_centers[None]
    sizes = mean_size_arr[None] + endpoints['size_residuals']
    sizes_g = jnp.broadcast_to(sizes[:, None], (B, NH, NS, 3)).reshape(-1, 3)
    headings_g = jnp.broadcast_to(headings[:, :, None], (B, NH, NS)).reshape(-1)
    centers_g = jnp.broadcast_to(endpoints['center'][:, None, None],
                                 (B, NH, NS, 3)).reshape(-1, 3)
    corners_3d = _corners_helper_ref(centers_g, headings_g, sizes_g).reshape(
        B, NH, NS, 8, 3)
    gt_mask = hc_onehot[:, :, None] * sc_onehot[:, None, :]
    corners_pred = jnp.sum(gt_mask[..., None, None] * corners_3d, axis=(1, 2))
    heading_label = jnp.sum(
        hc_onehot * (heading_residual_label[:, None] + bin_centers[None]), axis=1)
    size_label = jnp.sum(
        sc_onehot[:, :, None] * (mean_size_arr[None] + size_residual_label[:, None, :]),
        axis=1)
    corners_gt = _corners_helper_ref(center_label, heading_label, size_label)
    corners_flip = _corners_helper_ref(center_label, heading_label + np.pi, size_label)
    dist = jnp.minimum(jnp.sum(jnp.abs(corners_pred - corners_gt), axis=-1),
                       jnp.sum(jnp.abs(corners_pred - corners_flip), axis=-1))
    corner_loss = _huber_ref(dist, 1.0)

    return (seg_w * seg_loss
            + box_w * (center_loss + heading_class_loss + size_class_loss
                       + hrn_loss * 20.0 + size_res_loss * 20.0
                       + stage1_loss + corner_w * corner_loss))


if __name__ == "__main__":
    B, N = 8, 256
    NH, NS = NUM_HEADING_BIN, NUM_SIZE_CLUSTER
    seg_w, box_w, corner_w = 1.0, 1.0, 10.0

    key = jax.random.PRNGKey(0)
    ks = jax.random.split(key, 16)
    mask_label = jax.random.bernoulli(ks[0], 0.5, (B, N)).astype(jnp.int32)
    center_label = jax.random.normal(ks[1], (B, 3), dtype=jnp.float32)
    heading_class_label = jax.random.randint(ks[2], (B,), 0, NH)
    heading_residual_label = jax.random.uniform(ks[3], (B,), minval=-0.2, maxval=0.2)
    size_class_label = jax.random.randint(ks[4], (B,), 0, NS)
    size_residual_label = 0.1 * jax.random.normal(ks[5], (B, 3), dtype=jnp.float32)

    endpoints = {
        'mask_logits': jax.random.normal(ks[6], (B, N, 2), dtype=jnp.float32),
        'center': center_label + 0.1 * jax.random.normal(ks[7], (B, 3)),
        'stage1_center': center_label + 0.2 * jax.random.normal(ks[8], (B, 3)),
        'heading_scores': jax.random.normal(ks[9], (B, NH), dtype=jnp.float32),
        'heading_residuals_normalized': 0.1 * jax.random.normal(ks[10], (B, NH)),
        'heading_residuals': 0.1 * jax.random.normal(ks[11], (B, NH)),
        'size_scores': jax.random.normal(ks[12], (B, NS), dtype=jnp.float32),
        'size_residuals_normalized': 0.1 * jax.random.normal(ks[13], (B, NS, 3)),
        'size_residuals': 0.1 * jax.random.normal(ks[14], (B, NS, 3)),
    }
    mean_size_arr = jnp.asarray(get_mean_size_array(NS))

    total, losses = frustum_3d_loss(
        mask_label, center_label, heading_class_label, heading_residual_label,
        size_class_label, size_residual_label, endpoints, mean_size_arr,
        seg_loss_weight=seg_w, box_loss_weight=box_w, corner_loss_weight=corner_w)
    total = jax.block_until_ready(total)

    ref_total = jax.block_until_ready(reference_loss(
        mask_label, center_label, heading_class_label, heading_residual_label,
        size_class_label, size_residual_label, endpoints, mean_size_arr,
        NH=NH, NS=NS, seg_w=seg_w, box_w=box_w, corner_w=corner_w))

    np.testing.assert_allclose(np.asarray(total), np.asarray(ref_total),
                               rtol=2e-3, atol=2e-3)
    print("KERNEL_OK")
</pallas_src>

<mosaic_0001>
module attributes {stable_mosaic.version = 11 : i64} {
  func.func @_frustum_loss_kernel(%arg0: i32, %arg1: memref<112x8xf32, #tpu.memory_space<vmem>>, %arg2: memref<8x3xf32, #tpu.memory_space<vmem>>, %arg3: memref<2x8x256xbf16, #tpu.memory_space<vmem>>, %arg4: memref<8x256xbf16, #tpu.memory_space<vmem>>, %arg5: memref<1x8x128xf32, #tpu.memory_space<vmem>>) attributes {dimension_semantics = [#tpu.dimension_semantics<parallel>], iteration_bounds = array<i64: 1>, scalar_prefetch = 0 : i64, scratch_operands = 0 : i64, tpu.core_type = #tpu.core_type<tc>, window_params = [{transform_indices = @transform_0, window_bounds = array<i64: 112, 8>}, {pipeline_mode = #tpu.pipeline_mode<synchronous>, transform_indices = @transform_1, window_bounds = array<i64: 8, 3>}, {transform_indices = @transform_2, window_bounds = array<i64: 2, 8, 256>}, {transform_indices = @transform_3, window_bounds = array<i64: 8, 256>}, {transform_indices = @transform_4, window_bounds = array<i64: 1, 8, 128>}]} {
    %0 = tpu.iota {dimensions = array<i32: 1>} : vector<1x8xi32>
    %c8_i32 = arith.constant 8 : i32
    %1 = arith.muli %arg0, %c8_i32 : i32
    %2 = vector.broadcast %1 : i32 to vector<1x8xi32>
    %3 = arith.addi %0, %2 : vector<1x8xi32>
    %c8_i32_0 = arith.constant 8 : i32
    %4 = vector.broadcast %c8_i32_0 : i32 to vector<1x8xi32>
    %5 = arith.cmpi slt, %3, %4 : vector<1x8xi32>
    %6 = arith.extui %5 : vector<1x8xi1> to vector<1x8xi32>
    %7 = arith.sitofp %6 : vector<1x8xi32> to vector<1x8xf32>
    %8 = tpu.iota {dimensions = array<i32: 0>} : vector<8x1xi32>
    %c8_i32_1 = arith.constant 8 : i32
    %9 = arith.muli %arg0, %c8_i32_1 : i32
    %10 = vector.broadcast %9 : i32 to vector<8x1xi32>
    %11 = arith.addi %8, %10 : vector<8x1xi32>
    %c8_i32_2 = arith.constant 8 : i32
    %12 = vector.broadcast %c8_i32_2 : i32 to vector<8x1xi32>
    %13 = arith.cmpi slt, %11, %12 : vector<8x1xi32>
    %14 = arith.extui %13 : vector<8x1xi1> to vector<8x1xi32>
    %15 = arith.sitofp %14 : vector<8x1xi32> to vector<8x1xf32>
    %c0 = arith.constant 0 : index
    %c0_3 = arith.constant 0 : index
    %c0_4 = arith.constant 0 : index
    %16 = vector.load %arg3[%c0, %c0_3, %c0_4] : memref<2x8x256xbf16, #tpu.memory_space<vmem>>, vector<1x8x256xbf16>
    %17 = vector.shape_cast %16 : vector<1x8x256xbf16> to vector<8x256xbf16>
    %18 = arith.extf %17 : vector<8x256xbf16> to vector<8x256xf32>
    %c1 = arith.constant 1 : index
    %c0_5 = arith.constant 0 : index
    %c0_6 = arith.constant 0 : index
    %19 = vector.load %arg3[%c1, %c0_5, %c0_6] : memref<2x8x256xbf16, #tpu.memory_space<vmem>>, vector<1x8x256xbf16>
    %20 = vector.shape_cast %19 : vector<1x8x256xbf16> to vector<8x256xbf16>
    %21 = arith.extf %20 : vector<8x256xbf16> to vector<8x256xf32>
    %c0_7 = arith.constant 0 : index
    %c0_8 = arith.constant 0 : index
    %22 = vector.load %arg4[%c0_7, %c0_8] : memref<8x256xbf16, #tpu.memory_space<vmem>>, vector<8x256xbf16>
    %23 = arith.extf %22 : vector<8x256xbf16> to vector<8x256xf32>
    %cst = arith.constant 2.000000e+00 : f32
    %24 = vector.broadcast %cst : f32 to vector<8x256xf32>
    %25 = arith.mulf %24, %23 : vector<8x256xf32>
    %cst_9 = arith.constant 1.000000e+00 : f32
    %26 = vector.broadcast %cst_9 : f32 to vector<8x256xf32>
    %27 = arith.subf %26, %25 : vector<8x256xf32>
    %28 = arith.subf %21, %18 : vector<8x256xf32>
    %29 = arith.mulf %27, %28 : vector<8x256xf32>
    %cst_10 = arith.constant 0.000000e+00 : f32
    %30 = vector.broadcast %cst_10 : f32 to vector<8x256xf32>
    %31 = arith.maximumf %29, %30 : vector<8x256xf32>
    %32 = math.absf %29 : vector<8x256xf32>
    %cst_11 = arith.constant 0.000000e+00 : f32
    %33 = vector.broadcast %cst_11 : f32 to vector<8x256xf32>
    %34 = arith.subf %33, %32 : vector<8x256xf32>
    %35 = math.exp %34 : vector<8x256xf32>
    %cst_12 = arith.constant 1.000000e+00 : f32
    %36 = vector.broadcast %cst_12 : f32 to vector<8x256xf32>
    %37 = arith.addf %36, %35 : vector<8x256xf32>
    %38 = math.log %37 : vector<8x256xf32>
    %39 = arith.addf %31, %38 : vector<8x256xf32>
    %40 = vector.broadcast %15 : vector<8x1xf32> to vector<8x256xf32>
    %41 = arith.mulf %39, %40 : vector<8x256xf32>
    %42 = vector.shape_cast %41 : vector<8x256xf32> to vector<1x8x256xf32>
    %cst_13 = arith.constant dense<0.000000e+00> : vector<1xf32>
    %43 = vector.multi_reduction <add>, %42, %cst_13 [1, 2] : vector<1x8x256xf32> to vector<1xf32>
    %44 = vector.shape_cast %43 : vector<1xf32> to vector<1x1x1xf32>
    %45 = vector.extract %44[0, 0, 0] : f32 from vector<1x1x1xf32>
    %c0_14 = arith.constant 0 : index
    %c0_15 = arith.constant 0 : index
    %46 = vector.load %arg1[%c0_14, %c0_15] : memref<112x8xf32, #tpu.memory_space<vmem>>, vector<3x8xf32>
    %c3 = arith.constant 3 : index
    %c0_16 = arith.constant 0 : index
    %47 = vector.load %arg1[%c3, %c0_16] : memref<112x8xf32, #tpu.memory_space<vmem>>, vector<3x8xf32>
    %c6 = arith.constant 6 : index
    %c0_17 = arith.constant 0 : index
    %48 = vector.load %arg1[%c6, %c0_17] : memref<112x8xf32, #tpu.memory_space<vmem>>, vector<3x8xf32>
    %49 = arith.subf %46, %47 : vector<3x8xf32>
    %50 = math.absf %49 : vector<3x8xf32>
    %cst_18 = arith.constant dense<0.000000e+00> : vector<8xf32>
    %51 = vector.multi_reduction <add>, %50, %cst_18 [0] : vector<3x8xf32> to vector<8xf32>
    %52 = vector.shape_cast %51 : vector<8xf32> to vector<1x8xf32>
    %53 = math.absf %52 : vector<1x8xf32>
    %cst_19 = arith.constant 2.000000e+00 : f32
    %54 = vector.broadcast %cst_19 : f32 to vector<1x8xf32>
    %55 = arith.minimumf %53, %54 : vector<1x8xf32>
    %cst_20 = arith.constant 5.000000e-01 : f32
    %56 = vector.broadcast %cst_20 : f32 to vector<1x8xf32>
    %57 = arith.mulf %56, %55 : vector<1x8xf32>
    %58 = arith.mulf %57, %55 : vector<1x8xf32>
    %59 = arith.subf %53, %55 : vector<1x8xf32>
    %cst_21 = arith.constant 2.000000e+00 : f32
    %60 = vector.broadcast %cst_21 : f32 to vector<1x8xf32>
    %61 = arith.mulf %60, %59 : vector<1x8xf32>
    %62 = arith.addf %58, %61 : vector<1x8xf32>
    %63 = arith.mulf %62, %7 : vector<1x8xf32>
    %64 = vector.shape_cast %63 : vector<1x8xf32> to vector<1x1x8xf32>
    %cst_22 = arith.constant dense<0.000000e+00> : vector<1xf32>
    %65 = vector.multi_reduction <add>, %64, %cst_22 [1, 2] : vector<1x1x8xf32> to vector<1xf32>
    %66 = vector.shape_cast %65 : vector<1xf32> to vector<1x1x1xf32>
    %67 = vector.extract %66[0, 0, 0] : f32 from vector<1x1x1xf32>
    %68 = arith.subf %46, %48 : vector<3x8xf32>
    %69 = math.absf %68 : vector<3x8xf32>
    %cst_23 = arith.constant dense<0.000000e+00> : vector<8xf32>
    %70 = vector.multi_reduction <add>, %69, %cst_23 [0] : vector<3x8xf32> to vector<8xf32>
    %71 = vector.shape_cast %70 : vector<8xf32> to vector<1x8xf32>
    %72 = math.absf %71 : vector<1x8xf32>
    %cst_24 = arith.constant 1.000000e+00 : f32
    %73 = vector.broadcast %cst_24 : f32 to vector<1x8xf32>
    %74 = arith.minimumf %72, %73 : vector<1x8xf32>
    %cst_25 = arith.constant 5.000000e-01 : f32
    %75 = vector.broadcast %cst_25 : f32 to vector<1x8xf32>
    %76 = arith.mulf %75, %74 : vector<1x8xf32>
    %77 = arith.mulf %76, %74 : vector<1x8xf32>
    %78 = arith.subf %72, %74 : vector<1x8xf32>
    %cst_26 = arith.constant 1.000000e+00 : f32
    %79 = vector.broadcast %cst_26 : f32 to vector<1x8xf32>
    %80 = arith.mulf %79, %78 : vector<1x8xf32>
    %81 = arith.addf %77, %80 : vector<1x8xf32>
    %82 = arith.mulf %81, %7 : vector<1x8xf32>
    %83 = vector.shape_cast %82 : vector<1x8xf32> to vector<1x1x8xf32>
    %cst_27 = arith.constant dense<0.000000e+00> : vector<1xf32>
    %84 = vector.multi_reduction <add>, %83, %cst_27 [1, 2] : vector<1x1x8xf32> to vector<1xf32>
    %85 = vector.shape_cast %84 : vector<1xf32> to vector<1x1x1xf32>
    %86 = vector.extract %85[0, 0, 0] : f32 from vector<1x1x1xf32>
    %c9 = arith.constant 9 : index
    %c0_28 = arith.constant 0 : index
    %87 = vector.load %arg1[%c9, %c0_28] : memref<112x8xf32, #tpu.memory_space<vmem>>, vector<1x8xf32>
    %c15 = arith.constant 15 : index
    %c0_29 = arith.constant 0 : index
    %88 = vector.load %arg1[%c15, %c0_29] : memref<112x8xf32, #tpu.memory_space<vmem>>, vector<12x8xf32>
    %89 = tpu.iota {dimensions = array<i32: 0>} : vector<12x8xi32>
    %90 = arith.sitofp %89 : vector<12x8xi32> to vector<12x8xf32>
    %91 = vector.broadcast %87 : vector<1x8xf32> to vector<12x8xf32>
    %92 = arith.cmpf oeq, %90, %91 : vector<12x8xf32>
    %93 = arith.extui %92 : vector<12x8xi1> to vector<12x8xi32>
    %94 = arith.sitofp %93 : vector<12x8xi32> to vector<12x8xf32>
    %cst_30 = arith.constant dense<0xFF800000> : vector<8xf32>
    %95 = vector.multi_reduction <maximumf>, %88, %cst_30 [0] : vector<12x8xf32> to vector<8xf32>
    %96 = vector.shape_cast %95 : vector<8xf32> to vector<1x8xf32>
    %97 = vector.broadcast %96 : vector<1x8xf32> to vector<12x8xf32>
    %98 = arith.subf %88, %97 : vector<12x8xf32>
    %99 = math.exp %98 : vector<12x8xf32>
    %cst_31 = arith.constant dense<0.000000e+00> : vector<8xf32>
    %100 = vector.multi_reduction <add>, %99, %cst_31 [0] : vector<12x8xf32> to vector<8xf32>
    %101 = vector.shape_cast %100 : vector<8xf32> to vector<1x8xf32>
    %102 = math.log %101 : vector<1x8xf32>
    %103 = arith.addf %96, %102 : vector<1x8xf32>
    %104 = arith.mulf %88, %94 : vector<12x8xf32>
    %cst_32 = arith.constant dense<0.000000e+00> : vector<8xf32>
    %105 = vector.multi_reduction <add>, %104, %cst_32 [0] : vector<12x8xf32> to vector<8xf32>
    %106 = vector.shape_cast %105 : vector<8xf32> to vector<1x8xf32>
    %107 = arith.subf %103, %106 : vector<1x8xf32>
    %108 = arith.mulf %107, %7 : vector<1x8xf32>
    %109 = vector.shape_cast %108 : vector<1x8xf32> to vector<1x1x8xf32>
    %cst_33 = arith.constant dense<0.000000e+00> : vector<1xf32>
    %110 = vector.multi_reduction <add>, %109, %cst_33 [1, 2] : vector<1x1x8xf32> to vector<1xf32>
    %111 = vector.shape_cast %110 : vector<1xf32> to vector<1x1x1xf32>
    %112 = vector.extract %111[0, 0, 0] : f32 from vector<1x1x1xf32>
    %c10 = arith.constant 10 : index
    %c0_34 = arith.constant 0 : index
    %113 = vector.load %arg1[%c10, %c0_34] : memref<112x8xf32, #tpu.memory_space<vmem>>, vector<1x8xf32>
    %c27 = arith.constant 27 : index
    %c0_35 = arith.constant 0 : index
    %114 = vector.load %arg1[%c27, %c0_35] : memref<112x8xf32, #tpu.memory_space<vmem>>, vector<12x8xf32>
    %115 = arith.mulf %114, %94 : vector<12x8xf32>
    %cst_36 = arith.constant dense<0.000000e+00> : vector<8xf32>
    %116 = vector.multi_reduction <add>, %115, %cst_36 [0] : vector<12x8xf32> to vector<8xf32>
    %117 = vector.shape_cast %116 : vector<8xf32> to vector<1x8xf32>
    %cst_37 = arith.constant 3.8197186 : f32
    %118 = vector.broadcast %cst_37 : f32 to vector<1x8xf32>
    %119 = arith.mulf %113, %118 : vector<1x8xf32>
    %120 = arith.subf %117, %119 : vector<1x8xf32>
    %121 = math.absf %120 : vector<1x8xf32>
    %cst_38 = arith.constant 1.000000e+00 : f32
    %122 = vector.broadcast %cst_38 : f32 to vector<1x8xf32>
    %123 = arith.minimumf %121, %122 : vector<1x8xf32>
    %cst_39 = arith.constant 5.000000e-01 : f32
    %124 = vector.broadcast %cst_39 : f32 to vector<1x8xf32>
    %125 = arith.mulf %124, %123 : vector<1x8xf32>
    %126 = arith.mulf %125, %123 : vector<1x8xf32>
    %127 = arith.subf %121, %123 : vector<1x8xf32>
    %cst_40 = arith.constant 1.000000e+00 : f32
    %128 = vector.broadcast %cst_40 : f32 to vector<1x8xf32>
    %129 = arith.mulf %128, %127 : vector<1x8xf32>
    %130 = arith.addf %126, %129 : vector<1x8xf32>
    %131 = arith.mulf %130, %7 : vector<1x8xf32>
    %132 = vector.shape_cast %131 : vector<1x8xf32> to vector<1x1x8xf32>
    %cst_41 = arith.constant dense<0.000000e+00> : vector<1xf32>
    %133 = vector.multi_reduction <add>, %132, %cst_41 [1, 2] : vector<1x1x8xf32> to vector<1xf32>
    %134 = vector.shape_cast %133 : vector<1xf32> to vector<1x1x1xf32>
    %135 = vector.extract %134[0, 0, 0] : f32 from vector<1x1x1xf32>
    %c11 = arith.constant 11 : index
    %c0_42 = arith.constant 0 : index
    %136 = vector.load %arg1[%c11, %c0_42] : memref<112x8xf32, #tpu.memory_space<vmem>>, vector<1x8xf32>
    %c51 = arith.constant 51 : index
    %c0_43 = arith.constant 0 : index
    %137 = vector.load %arg1[%c51, %c0_43] : memref<112x8xf32, #tpu.memory_space<vmem>>, vector<8x8xf32>
    %138 = tpu.iota {dimensions = array<i32: 0>} : vector<8x8xi32>
    %139 = arith.sitofp %138 : vector<8x8xi32> to vector<8x8xf32>
    %140 = vector.broadcast %136 : vector<1x8xf32> to vector<8x8xf32>
    %141 = arith.cmpf oeq, %139, %140 : vector<8x8xf32>
    %142 = arith.extui %141 : vector<8x8xi1> to vector<8x8xi32>
    %143 = arith.sitofp %142 : vector<8x8xi32> to vector<8x8xf32>
    %cst_44 = arith.constant dense<0xFF800000> : vector<8xf32>
    %144 = vector.multi_reduction <maximumf>, %137, %cst_44 [0] : vector<8x8xf32> to vector<8xf32>
    %145 = vector.shape_cast %144 : vector<8xf32> to vector<1x8xf32>
    %146 = vector.broadcast %145 : vector<1x8xf32> to vector<8x8xf32>
    %147 = arith.subf %137, %146 : vector<8x8xf32>
    %148 = math.exp %147 : vector<8x8xf32>
    %cst_45 = arith.constant dense<0.000000e+00> : vector<8xf32>
    %149 = vector.multi_reduction <add>, %148, %cst_45 [0] : vector<8x8xf32> to vector<8xf32>
    %150 = vector.shape_cast %149 : vector<8xf32> to vector<1x8xf32>
    %151 = math.log %150 : vector<1x8xf32>
    %152 = arith.addf %145, %151 : vector<1x8xf32>
    %153 = arith.mulf %137, %143 : vector<8x8xf32>
    %cst_46 = arith.constant dense<0.000000e+00> : vector<8xf32>
    %154 = vector.multi_reduction <add>, %153, %cst_46 [0] : vector<8x8xf32> to vector<8xf32>
    %155 = vector.shape_cast %154 : vector<8xf32> to vector<1x8xf32>
    %156 = arith.subf %152, %155 : vector<1x8xf32>
    %157 = arith.mulf %156, %7 : vector<1x8xf32>
    %158 = vector.shape_cast %157 : vector<1x8xf32> to vector<1x1x8xf32>
    %cst_47 = arith.constant dense<0.000000e+00> : vector<1xf32>
    %159 = vector.multi_reduction <add>, %158, %cst_47 [1, 2] : vector<1x1x8xf32> to vector<1xf32>
    %160 = vector.shape_cast %159 : vector<1xf32> to vector<1x1x1xf32>
    %161 = vector.extract %160[0, 0, 0] : f32 from vector<1x1x1xf32>
    %c0_48 = arith.constant 0 : index
    %c0_49 = arith.constant 0 : index
    %162 = vector.load %arg2[%c0_48, %c0_49] : memref<8x3xf32, #tpu.memory_space<vmem>>, vector<8x3xf32>
    %163 = vector.extract_strided_slice %162 {offsets = [0, 0], sizes = [8, 1], strides = [1, 1]} : vector<8x3xf32> to vector<8x1xf32>
    %164 = vector.extract_strided_slice %162 {offsets = [0, 1], sizes = [8, 1], strides = [1, 1]} : vector<8x3xf32> to vector<8x1xf32>
    %165 = vector.extract_strided_slice %162 {offsets = [0, 2], sizes = [8, 1], strides = [1, 1]} : vector<8x3xf32> to vector<8x1xf32>
    %166 = vector.broadcast %163 : vector<8x1xf32> to vector<8x8xf32>
    %167 = arith.mulf %143, %166 : vector<8x8xf32>
    %cst_50 = arith.constant dense<0.000000e+00> : vector<8xf32>
    %168 = vector.multi_reduction <add>, %167, %cst_50 [0] : vector<8x8xf32> to vector<8xf32>
    %169 = vector.shape_cast %168 : vector<8xf32> to vector<1x8xf32>
    %170 = vector.broadcast %164 : vector<8x1xf32> to vector<8x8xf32>
    %171 = arith.mulf %143, %170 : vector<8x8xf32>
    %cst_51 = arith.constant dense<0.000000e+00> : vector<8xf32>
    %172 = vector.multi_reduction <add>, %171, %cst_51 [0] : vector<8x8xf32> to vector<8xf32>
    %173 = vector.shape_cast %172 : vector<8xf32> to vector<1x8xf32>
    %174 = vector.broadcast %165 : vector<8x1xf32> to vector<8x8xf32>
    %175 = arith.mulf %143, %174 : vector<8x8xf32>
    %cst_52 = arith.constant dense<0.000000e+00> : vector<8xf32>
    %176 = vector.multi_reduction <add>, %175, %cst_52 [0] : vector<8x8xf32> to vector<8xf32>
    %177 = vector.shape_cast %176 : vector<8xf32> to vector<1x8xf32>
    %c59 = arith.constant 59 : index
    %c0_53 = arith.constant 0 : index
    %178 = vector.load %arg1[%c59, %c0_53] : memref<112x8xf32, #tpu.memory_space<vmem>>, vector<8x8xf32>
    %179 = arith.mulf %143, %178 : vector<8x8xf32>
    %cst_54 = arith.constant dense<0.000000e+00> : vector<8xf32>
    %180 = vector.multi_reduction <add>, %179, %cst_54 [0] : vector<8x8xf32> to vector<8xf32>
    %181 = vector.shape_cast %180 : vector<8xf32> to vector<1x8xf32>
    %c67 = arith.constant 67 : index
    %c0_55 = arith.constant 0 : index
    %182 = vector.load %arg1[%c67, %c0_55] : memref<112x8xf32, #tpu.memory_space<vmem>>, vector<8x8xf32>
    %183 = arith.mulf %143, %182 : vector<8x8xf32>
    %cst_56 = arith.constant dense<0.000000e+00> : vector<8xf32>
    %184 = vector.multi_reduction <add>, %183, %cst_56 [0] : vector<8x8xf32> to vector<8xf32>
    %185 = vector.shape_cast %184 : vector<8xf32> to vector<1x8xf32>
    %c75 = arith.constant 75 : index
    %c0_57 = arith.constant 0 : index
    %186 = vector.load %arg1[%c75, %c0_57] : memref<112x8xf32, #tpu.memory_space<vmem>>, vector<8x8xf32>
    %187 = arith.mulf %143, %186 : vector<8x8xf32>
    %cst_58 = arith.constant dense<0.000000e+00> : vector<8xf32>
    %188 = vector.multi_reduction <add>, %187, %cst_58 [0] : vector<8x8xf32> to vector<8xf32>
    %189 = vector.shape_cast %188 : vector<8xf32> to vector<1x8xf32>
    %c12 = arith.constant 12 : index
    %c0_59 = arith.constant 0 : index
    %190 = vector.load %arg1[%c12, %c0_59] : memref<112x8xf32, #tpu.memory_space<vmem>>, vector<3x8xf32>
    %191 = vector.extract_strided_slice %190 {offsets = [0, 0], sizes = [1, 8], strides = [1, 1]} : vector<3x8xf32> to vector<1x8xf32>
    %192 = arith.divf %191, %169 : vector<1x8xf32>
    %193 = vector.extract_strided_slice %190 {offsets = [1, 0], sizes = [1, 8], strides = [1, 1]} : vector<3x8xf32> to vector<1x8xf32>
    %194 = arith.divf %193, %173 : vector<1x8xf32>
    %195 = vector.extract_strided_slice %190 {offsets = [2, 0], sizes = [1, 8], strides = [1, 1]} : vector<3x8xf32> to vector<1x8xf32>
    %196 = arith.divf %195, %177 : vector<1x8xf32>
    %197 = arith.subf %192, %181 : vector<1x8xf32>
    %198 = math.absf %197 : vector<1x8xf32>
    %199 = arith.subf %194, %185 : vector<1x8xf32>
    %200 = math.absf %199 : vector<1x8xf32>
    %201 = arith.addf %198, %200 : vector<1x8xf32>
    %202 = arith.subf %196, %189 : vector<1x8xf32>
    %203 = math.absf %202 : vector<1x8xf32>
    %204 = arith.addf %201, %203 : vector<1x8xf32>
    %205 = math.absf %204 : vector<1x8xf32>
    %cst_60 = arith.constant 1.000000e+00 : f32
    %206 = vector.broadcast %cst_60 : f32 to vector<1x8xf32>
    %207 = arith.minimumf %205, %206 : vector<1x8xf32>
    %cst_61 = arith.constant 5.000000e-01 : f32
    %208 = vector.broadcast %cst_61 : f32 to vector<1x8xf32>
    %209 = arith.mulf %208, %207 : vector<1x8xf32>
    %210 = arith.mulf %209, %207 : vector<1x8xf32>
    %211 = arith.subf %205, %207 : vector<1x8xf32>
    %cst_62 = arith.constant 1.000000e+00 : f32
    %212 = vector.broadcast %cst_62 : f32 to vector<1x8xf32>
    %213 = arith.mulf %212, %211 : vector<1x8xf32>
    %214 = arith.addf %210, %213 : vector<1x8xf32>
    %215 = arith.mulf %214, %7 : vector<1x8xf32>
    %216 = vector.shape_cast %215 : vector<1x8xf32> to vector<1x1x8xf32>
    %cst_63 = arith.constant dense<0.000000e+00> : vector<1xf32>
    %217 = vector.multi_reduction <add>, %216, %cst_63 [1, 2] : vector<1x1x8xf32> to vector<1xf32>
    %218 = vector.shape_cast %217 : vector<1xf32> to vector<1x1x1xf32>
    %219 = vector.extract %218[0, 0, 0] : f32 from vector<1x1x1xf32>
    %cst_64 = arith.constant 0.52359879 : f32
    %220 = vector.broadcast %cst_64 : f32 to vector<12x8xf32>
    %221 = arith.mulf %90, %220 : vector<12x8xf32>
    %c39 = arith.constant 39 : index
    %c0_65 = arith.constant 0 : index
    %222 = vector.load %arg1[%c39, %c0_65] : memref<112x8xf32, #tpu.memory_space<vmem>>, vector<12x8xf32>
    %223 = arith.addf %222, %221 : vector<12x8xf32>
    %224 = arith.mulf %94, %223 : vector<12x8xf32>
    %cst_66 = arith.constant dense<0.000000e+00> : vector<8xf32>
    %225 = vector.multi_reduction <add>, %224, %cst_66 [0] : vector<12x8xf32> to vector<8xf32>
    %226 = vector.shape_cast %225 : vector<8xf32> to vector<1x8xf32>
    %227 = arith.mulf %94, %221 : vector<12x8xf32>
    %cst_67 = arith.constant dense<0.000000e+00> : vector<8xf32>
    %228 = vector.multi_reduction <add>, %227, %cst_67 [0] : vector<12x8xf32> to vector<8xf32>
    %229 = vector.shape_cast %228 : vector<8xf32> to vector<1x8xf32>
    %230 = arith.addf %113, %229 : vector<1x8xf32>
    %c83 = arith.constant 83 : index
    %c0_68 = arith.constant 0 : index
    %231 = vector.load %arg1[%c83, %c0_68] : memref<112x8xf32, #tpu.memory_space<vmem>>, vector<8x8xf32>
    %232 = vector.broadcast %163 : vector<8x1xf32> to vector<8x8xf32>
    %233 = arith.addf %232, %231 : vector<8x8xf32>
    %234 = arith.mulf %143, %233 : vector<8x8xf32>
    %cst_69 = arith.constant dense<0.000000e+00> : vector<8xf32>
    %235 = vector.multi_reduction <add>, %234, %cst_69 [0] : vector<8x8xf32> to vector<8xf32>
    %236 = vector.shape_cast %235 : vector<8xf32> to vector<1x8xf32>
    %c91 = arith.constant 91 : index
    %c0_70 = arith.constant 0 : index
    %237 = vector.load %arg1[%c91, %c0_70] : memref<112x8xf32, #tpu.memory_space<vmem>>, vector<8x8xf32>
    %238 = vector.broadcast %164 : vector<8x1xf32> to vector<8x8xf32>
    %239 = arith.addf %238, %237 : vector<8x8xf32>
    %240 = arith.mulf %143, %239 : vector<8x8xf32>
    %cst_71 = arith.constant dense<0.000000e+00> : vector<8xf32>
    %241 = vector.multi_reduction <add>, %240, %cst_71 [0] : vector<8x8xf32> to vector<8xf32>
    %242 = vector.shape_cast %241 : vector<8xf32> to vector<1x8xf32>
    %c99 = arith.constant 99 : index
    %c0_72 = arith.constant 0 : index
    %243 = vector.load %arg1[%c99, %c0_72] : memref<112x8xf32, #tpu.memory_space<vmem>>, vector<8x8xf32>
    %244 = vector.broadcast %165 : vector<8x1xf32> to vector<8x8xf32>
    %245 = arith.addf %244, %243 : vector<8x8xf32>
    %246 = arith.mulf %143, %245 : vector<8x8xf32>
    %cst_73 = arith.constant dense<0.000000e+00> : vector<8xf32>
    %247 = vector.multi_reduction <add>, %246, %cst_73 [0] : vector<8x8xf32> to vector<8xf32>
    %248 = vector.shape_cast %247 : vector<8xf32> to vector<1x8xf32>
    %249 = vector.extract_strided_slice %190 {offsets = [0, 0], sizes = [1, 8], strides = [1, 1]} : vector<3x8xf32> to vector<1x8xf32>
    %250 = arith.addf %169, %249 : vector<1x8xf32>
    %251 = vector.extract_strided_slice %190 {offsets = [1, 0], sizes = [1, 8], strides = [1, 1]} : vector<3x8xf32> to vector<1x8xf32>
    %252 = arith.addf %173, %251 : vector<1x8xf32>
    %253 = vector.extract_strided_slice %190 {offsets = [2, 0], sizes = [1, 8], strides = [1, 1]} : vector<3x8xf32> to vector<1x8xf32>
    %254 = arith.addf %177, %253 : vector<1x8xf32>
    %255 = tpu.iota {dimensions = array<i32: 0>} : vector<8x1xi32>
    %c3_i32 = arith.constant 3 : i32
    %256 = vector.broadcast %c3_i32 : i32 to vector<8x1xi32>
    %257 = arith.andi %255, %256 : vector<8x1xi32>
    %c2_i32 = arith.constant 2 : i32
    %258 = vector.broadcast %c2_i32 : i32 to vector<8x1xi32>
    %259 = arith.cmpi slt, %257, %258 : vector<8x1xi32>
    %cst_74 = arith.constant 1.000000e+00 : f32
    %cst_75 = arith.constant -1.000000e+00 : f32
    %260 = vector.broadcast %cst_74 : f32 to vector<8x1xf32>
    %261 = vector.broadcast %cst_75 : f32 to vector<8x1xf32>
    %262 = arith.select %259, %260, %261 : vector<8x1xi1>, vector<8x1xf32>
    %c4_i32 = arith.constant 4 : i32
    %263 = vector.broadcast %c4_i32 : i32 to vector<8x1xi32>
    %264 = arith.cmpi slt, %255, %263 : vector<8x1xi32>
    %cst_76 = arith.constant 1.000000e+00 : f32
    %cst_77 = arith.constant -1.000000e+00 : f32
    %265 = vector.broadcast %cst_76 : f32 to vector<8x1xf32>
    %266 = vector.broadcast %cst_77 : f32 to vector<8x1xf32>
    %267 = arith.select %264, %265, %266 : vector<8x1xi1>, vector<8x1xf32>
    %c0_i32 = arith.constant 0 : i32
    %268 = vector.broadcast %c0_i32 : i32 to vector<8x1xi32>
    %269 = arith.cmpi eq, %257, %268 : vector<8x1xi32>
    %c3_i32_78 = arith.constant 3 : i32
    %270 = vector.broadcast %c3_i32_78 : i32 to vector<8x1xi32>
    %271 = arith.cmpi eq, %257, %270 : vector<8x1xi32>
    %272 = arith.ori %269, %271 : vector<8x1xi1>
    %cst_79 = arith.constant 1.000000e+00 : f32
    %cst_80 = arith.constant -1.000000e+00 : f32
    %273 = vector.broadcast %cst_79 : f32 to vector<8x1xf32>
    %274 = vector.broadcast %cst_80 : f32 to vector<8x1xf32>
    %275 = arith.select %272, %273, %274 : vector<8x1xi1>, vector<8x1xf32>
    %276 = vector.extract_strided_slice %47 {offsets = [0, 0], sizes = [1, 8], strides = [1, 1]} : vector<3x8xf32> to vector<1x8xf32>
    %277 = vector.extract_strided_slice %47 {offsets = [1, 0], sizes = [1, 8], strides = [1, 1]} : vector<3x8xf32> to vector<1x8xf32>
    %278 = vector.extract_strided_slice %47 {offsets = [2, 0], sizes = [1, 8], strides = [1, 1]} : vector<3x8xf32> to vector<1x8xf32>
    %cst_81 = arith.constant 5.000000e-01 : f32
    %279 = vector.broadcast %cst_81 : f32 to vector<1x8xf32>
    %280 = arith.mulf %279, %236 : vector<1x8xf32>
    %281 = vector.broadcast %280 : vector<1x8xf32> to vector<8x8xf32>
    %282 = vector.broadcast %262 : vector<8x1xf32> to vector<8x8xf32>
    %283 = arith.mulf %281, %282 : vector<8x8xf32>
    %cst_82 = arith.constant 5.000000e-01 : f32
    %284 = vector.broadcast %cst_82 : f32 to vector<1x8xf32>
    %285 = arith.mulf %284, %248 : vector<1x8xf32>
    %286 = vector.broadcast %285 : vector<1x8xf32> to vector<8x8xf32>
    %287 = vector.broadcast %267 : vector<8x1xf32> to vector<8x8xf32>
    %288 = arith.mulf %286, %287 : vector<8x8xf32>
    %cst_83 = arith.constant 5.000000e-01 : f32
    %289 = vector.broadcast %cst_83 : f32 to vector<1x8xf32>
    %290 = arith.mulf %289, %242 : vector<1x8xf32>
    %291 = vector.broadcast %290 : vector<1x8xf32> to vector<8x8xf32>
    %292 = vector.broadcast %275 : vector<8x1xf32> to vector<8x8xf32>
    %293 = arith.mulf %291, %292 : vector<8x8xf32>
    %294 = math.cos %226 : vector<1x8xf32>
    %295 = math.sin %226 : vector<1x8xf32>
    %296 = vector.broadcast %294 : vector<1x8xf32> to vector<8x8xf32>
    %297 = arith.mulf %296, %283 : vector<8x8xf32>
    %298 = vector.broadcast %295 : vector<1x8xf32> to vector<8x8xf32>
    %299 = arith.mulf %298, %293 : vector<8x8xf32>
    %300 = arith.addf %297, %299 : vector<8x8xf32>
    %301 = vector.broadcast %276 : vector<1x8xf32> to vector<8x8xf32>
    %302 = arith.addf %300, %301 : vector<8x8xf32>
    %303 = vector.broadcast %277 : vector<1x8xf32> to vector<8x8xf32>
    %304 = arith.addf %288, %303 : vector<8x8xf32>
    %cst_84 = arith.constant 0.000000e+00 : f32
    %305 = vector.broadcast %cst_84 : f32 to vector<1x8xf32>
    %306 = arith.subf %305, %295 : vector<1x8xf32>
    %307 = vector.broadcast %306 : vector<1x8xf32> to vector<8x8xf32>
    %308 = arith.mulf %307, %283 : vector<8x8xf32>
    %309 = vector.broadcast %294 : vector<1x8xf32> to vector<8x8xf32>
    %310 = arith.mulf %309, %293 : vector<8x8xf32>
    %311 = arith.addf %308, %310 : vector<8x8xf32>
    %312 = vector.broadcast %278 : vector<1x8xf32> to vector<8x8xf32>
    %313 = arith.addf %311, %312 : vector<8x8xf32>
    %314 = vector.extract_strided_slice %46 {offsets = [0, 0], sizes = [1, 8], strides = [1, 1]} : vector<3x8xf32> to vector<1x8xf32>
    %315 = vector.extract_strided_slice %46 {offsets = [1, 0], sizes = [1, 8], strides = [1, 1]} : vector<3x8xf32> to vector<1x8xf32>
    %316 = vector.extract_strided_slice %46 {offsets = [2, 0], sizes = [1, 8], strides = [1, 1]} : vector<3x8xf32> to vector<1x8xf32>
    %cst_85 = arith.constant 5.000000e-01 : f32
    %317 = vector.broadcast %cst_85 : f32 to vector<1x8xf32>
    %318 = arith.mulf %317, %250 : vector<1x8xf32>
    %319 = vector.broadcast %318 : vector<1x8xf32> to vector<8x8xf32>
    %320 = vector.broadcast %262 : vector<8x1xf32> to vector<8x8xf32>
    %321 = arith.mulf %319, %320 : vector<8x8xf32>
    %cst_86 = arith.constant 5.000000e-01 : f32
    %322 = vector.broadcast %cst_86 : f32 to vector<1x8xf32>
    %323 = arith.mulf %322, %254 : vector<1x8xf32>
    %324 = vector.broadcast %323 : vector<1x8xf32> to vector<8x8xf32>
    %325 = vector.broadcast %267 : vector<8x1xf32> to vector<8x8xf32>
    %326 = arith.mulf %324, %325 : vector<8x8xf32>
    %cst_87 = arith.constant 5.000000e-01 : f32
    %327 = vector.broadcast %cst_87 : f32 to vector<1x8xf32>
    %328 = arith.mulf %327, %252 : vector<1x8xf32>
    %329 = vector.broadcast %328 : vector<1x8xf32> to vector<8x8xf32>
    %330 = vector.broadcast %275 : vector<8x1xf32> to vector<8x8xf32>
    %331 = arith.mulf %329, %330 : vector<8x8xf32>
    %332 = math.cos %230 : vector<1x8xf32>
    %333 = math.sin %230 : vector<1x8xf32>
    %334 = vector.broadcast %332 : vector<1x8xf32> to vector<8x8xf32>
    %335 = arith.mulf %334, %321 : vector<8x8xf32>
    %336 = vector.broadcast %333 : vector<1x8xf32> to vector<8x8xf32>
    %337 = arith.mulf %336, %331 : vector<8x8xf32>
    %338 = arith.addf %335, %337 : vector<8x8xf32>
    %339 = vector.broadcast %314 : vector<1x8xf32> to vector<8x8xf32>
    %340 = arith.addf %338, %339 : vector<8x8xf32>
    %341 = vector.broadcast %315 : vector<1x8xf32> to vector<8x8xf32>
    %342 = arith.addf %326, %341 : vector<8x8xf32>
    %cst_88 = arith.constant 0.000000e+00 : f32
    %343 = vector.broadcast %cst_88 : f32 to vector<1x8xf32>
    %344 = arith.subf %343, %333 : vector<1x8xf32>
    %345 = vector.broadcast %344 : vector<1x8xf32> to vector<8x8xf32>
    %346 = arith.mulf %345, %321 : vector<8x8xf32>
    %347 = vector.broadcast %332 : vector<1x8xf32> to vector<8x8xf32>
    %348 = arith.mulf %347, %331 : vector<8x8xf32>
    %349 = arith.addf %346, %348 : vector<8x8xf32>
    %350 = vector.broadcast %316 : vector<1x8xf32> to vector<8x8xf32>
    %351 = arith.addf %349, %350 : vector<8x8xf32>
    %352 = vector.extract_strided_slice %46 {offsets = [0, 0], sizes = [1, 8], strides = [1, 1]} : vector<3x8xf32> to vector<1x8xf32>
    %353 = vector.extract_strided_slice %46 {offsets = [1, 0], sizes = [1, 8], strides = [1, 1]} : vector<3x8xf32> to vector<1x8xf32>
    %354 = vector.extract_strided_slice %46 {offsets = [2, 0], sizes = [1, 8], strides = [1, 1]} : vector<3x8xf32> to vector<1x8xf32>
    %cst_89 = arith.constant 3.14159274 : f32
    %355 = vector.broadcast %cst_89 : f32 to vector<1x8xf32>
    %356 = arith.addf %230, %355 : vector<1x8xf32>
    %cst_90 = arith.constant 5.000000e-01 : f32
    %357 = vector.broadcast %cst_90 : f32 to vector<1x8xf32>
    %358 = arith.mulf %357, %250 : vector<1x8xf32>
    %359 = vector.broadcast %358 : vector<1x8xf32> to vector<8x8xf32>
    %360 = vector.broadcast %262 : vector<8x1xf32> to vector<8x8xf32>
    %361 = arith.mulf %359, %360 : vector<8x8xf32>
    %cst_91 = arith.constant 5.000000e-01 : f32
    %362 = vector.broadcast %cst_91 : f32 to vector<1x8xf32>
    %363 = arith.mulf %362, %254 : vector<1x8xf32>
    %364 = vector.broadcast %363 : vector<1x8xf32> to vector<8x8xf32>
    %365 = vector.broadcast %267 : vector<8x1xf32> to vector<8x8xf32>
    %366 = arith.mulf %364, %365 : vector<8x8xf32>
    %cst_92 = arith.constant 5.000000e-01 : f32
    %367 = vector.broadcast %cst_92 : f32 to vector<1x8xf32>
    %368 = arith.mulf %367, %252 : vector<1x8xf32>
    %369 = vector.broadcast %368 : vector<1x8xf32> to vector<8x8xf32>
    %370 = vector.broadcast %275 : vector<8x1xf32> to vector<8x8xf32>
    %371 = arith.mulf %369, %370 : vector<8x8xf32>
    %372 = math.cos %356 : vector<1x8xf32>
    %373 = math.sin %356 : vector<1x8xf32>
    %374 = vector.broadcast %372 : vector<1x8xf32> to vector<8x8xf32>
    %375 = arith.mulf %374, %361 : vector<8x8xf32>
    %376 = vector.broadcast %373 : vector<1x8xf32> to vector<8x8xf32>
    %377 = arith.mulf %376, %371 : vector<8x8xf32>
    %378 = arith.addf %375, %377 : vector<8x8xf32>
    %379 = vector.broadcast %352 : vector<1x8xf32> to vector<8x8xf32>
    %380 = arith.addf %378, %379 : vector<8x8xf32>
    %381 = vector.broadcast %353 : vector<1x8xf32> to vector<8x8xf32>
    %382 = arith.addf %366, %381 : vector<8x8xf32>
    %cst_93 = arith.constant 0.000000e+00 : f32
    %383 = vector.broadcast %cst_93 : f32 to vector<1x8xf32>
    %384 = arith.subf %383, %373 : vector<1x8xf32>
    %385 = vector.broadcast %384 : vector<1x8xf32> to vector<8x8xf32>
    %386 = arith.mulf %385, %361 : vector<8x8xf32>
    %387 = vector.broadcast %372 : vector<1x8xf32> to vector<8x8xf32>
    %388 = arith.mulf %387, %371 : vector<8x8xf32>
    %389 = arith.addf %386, %388 : vector<8x8xf32>
    %390 = vector.broadcast %354 : vector<1x8xf32> to vector<8x8xf32>
    %391 = arith.addf %389, %390 : vector<8x8xf32>
    %392 = arith.subf %302, %340 : vector<8x8xf32>
    %393 = math.absf %392 : vector<8x8xf32>
    %394 = arith.subf %304, %342 : vector<8x8xf32>
    %395 = math.absf %394 : vector<8x8xf32>
    %396 = arith.addf %393, %395 : vector<8x8xf32>
    %397 = arith.subf %313, %351 : vector<8x8xf32>
    %398 = math.absf %397 : vector<8x8xf32>
    %399 = arith.addf %396, %398 : vector<8x8xf32>
    %400 = arith.subf %302, %380 : vector<8x8xf32>
    %401 = math.absf %400 : vector<8x8xf32>
    %402 = arith.subf %304, %382 : vector<8x8xf32>
    %403 = math.absf %402 : vector<8x8xf32>
    %404 = arith.addf %401, %403 : vector<8x8xf32>
    %405 = arith.subf %313, %391 : vector<8x8xf32>
    %406 = math.absf %405 : vector<8x8xf32>
    %407 = arith.addf %404, %406 : vector<8x8xf32>
    %408 = arith.minimumf %399, %407 : vector<8x8xf32>
    %409 = math.absf %408 : vector<8x8xf32>
    %cst_94 = arith.constant 1.000000e+00 : f32
    %410 = vector.broadcast %cst_94 : f32 to vector<8x8xf32>
    %411 = arith.minimumf %409, %410 : vector<8x8xf32>
    %cst_95 = arith.constant 5.000000e-01 : f32
    %412 = vector.broadcast %cst_95 : f32 to vector<8x8xf32>
    %413 = arith.mulf %412, %411 : vector<8x8xf32>
    %414 = arith.mulf %413, %411 : vector<8x8xf32>
    %415 = arith.subf %409, %411 : vector<8x8xf32>
    %cst_96 = arith.constant 1.000000e+00 : f32
    %416 = vector.broadcast %cst_96 : f32 to vector<8x8xf32>
    %417 = arith.mulf %416, %415 : vector<8x8xf32>
    %418 = arith.addf %414, %417 : vector<8x8xf32>
    %419 = vector.broadcast %7 : vector<1x8xf32> to vector<8x8xf32>
    %420 = arith.mulf %418, %419 : vector<8x8xf32>
    %421 = vector.shape_cast %420 : vector<8x8xf32> to vector<1x8x8xf32>
    %cst_97 = arith.constant dense<0.000000e+00> : vector<1xf32>
    %422 = vector.multi_reduction <add>, %421, %cst_97 [1, 2] : vector<1x8x8xf32> to vector<1xf32>
    %423 = vector.shape_cast %422 : vector<1xf32> to vector<1x1x1xf32>
    %424 = vector.extract %423[0, 0, 0] : f32 from vector<1x1x1xf32>
    %425 = tpu.iota {dimensions = array<i32: 0>} : vector<8x128xi32>
    %c0_i32_98 = arith.constant 0 : i32
    %426 = vector.broadcast %c0_i32_98 : i32 to vector<8x128xi32>
    %427 = arith.cmpi eq, %425, %426 : vector<8x128xi32>
    %cst_99 = arith.constant 0.000000e+00 : f32
    %428 = vector.broadcast %45 : f32 to vector<8x128xf32>
    %429 = vector.broadcast %cst_99 : f32 to vector<8x128xf32>
    %430 = arith.select %427, %428, %429 : vector<8x128xi1>, vector<8x128xf32>
    %c1_i32 = arith.constant 1 : i32
    %431 = vector.broadcast %c1_i32 : i32 to vector<8x128xi32>
    %432 = arith.cmpi eq, %425, %431 : vector<8x128xi32>
    %cst_100 = arith.constant 0.000000e+00 : f32
    %433 = vector.broadcast %67 : f32 to vector<8x128xf32>
    %434 = vector.broadcast %cst_100 : f32 to vector<8x128xf32>
    %435 = arith.select %432, %433, %434 : vector<8x128xi1>, vector<8x128xf32>
    %436 = arith.addf %430, %435 : vector<8x128xf32>
    %c2_i32_101 = arith.constant 2 : i32
    %437 = vector.broadcast %c2_i32_101 : i32 to vector<8x128xi32>
    %438 = arith.cmpi eq, %425, %437 : vector<8x128xi32>
    %cst_102 = arith.constant 0.000000e+00 : f32
    %439 = vector.broadcast %86 : f32 to vector<8x128xf32>
    %440 = vector.broadcast %cst_102 : f32 to vector<8x128xf32>
    %441 = arith.select %438, %439, %440 : vector<8x128xi1>, vector<8x128xf32>
    %442 = arith.addf %436, %441 : vector<8x128xf32>
    %c3_i32_103 = arith.constant 3 : i32
    %443 = vector.broadcast %c3_i32_103 : i32 to vector<8x128xi32>
    %444 = arith.cmpi eq, %425, %443 : vector<8x128xi32>
    %cst_104 = arith.constant 0.000000e+00 : f32
    %445 = vector.broadcast %112 : f32 to vector<8x128xf32>
    %446 = vector.broadcast %cst_104 : f32 to vector<8x128xf32>
    %447 = arith.select %444, %445, %446 : vector<8x128xi1>, vector<8x128xf32>
    %448 = arith.addf %442, %447 : vector<8x128xf32>
    %c4_i32_105 = arith.constant 4 : i32
    %449 = vector.broadcast %c4_i32_105 : i32 to vector<8x128xi32>
    %450 = arith.cmpi eq, %425, %449 : vector<8x128xi32>
    %cst_106 = arith.constant 0.000000e+00 : f32
    %451 = vector.broadcast %135 : f32 to vector<8x128xf32>
    %452 = vector.broadcast %cst_106 : f32 to vector<8x128xf32>
    %453 = arith.select %450, %451, %452 : vector<8x128xi1>, vector<8x128xf32>
    %454 = arith.addf %448, %453 : vector<8x128xf32>
    %c5_i32 = arith.constant 5 : i32
    %455 = vector.broadcast %c5_i32 : i32 to vector<8x128xi32>
    %456 = arith.cmpi eq, %425, %455 : vector<8x128xi32>
    %cst_107 = arith.constant 0.000000e+00 : f32
    %457 = vector.broadcast %161 : f32 to vector<8x128xf32>
    %458 = vector.broadcast %cst_107 : f32 to vector<8x128xf32>
    %459 = arith.select %456, %457, %458 : vector<8x128xi1>, vector<8x128xf32>
    %460 = arith.addf %454, %459 : vector<8x128xf32>
    %c6_i32 = arith.constant 6 : i32
    %461 = vector.broadcast %c6_i32 : i32 to vector<8x128xi32>
    %462 = arith.cmpi eq, %425, %461 : vector<8x128xi32>
    %cst_108 = arith.constant 0.000000e+00 : f32
    %463 = vector.broadcast %219 : f32 to vector<8x128xf32>
    %464 = vector.broadcast %cst_108 : f32 to vector<8x128xf32>
    %465 = arith.select %462, %463, %464 : vector<8x128xi1>, vector<8x128xf32>
    %466 = arith.addf %460, %465 : vector<8x128xf32>
    %c7_i32 = arith.constant 7 : i32
    %467 = vector.broadcast %c7_i32 : i32 to vector<8x128xi32>
    %468 = arith.cmpi eq, %425, %467 : vector<8x128xi32>
    %cst_109 = arith.constant 0.000000e+00 : f32
    %469 = vector.broadcast %424 : f32 to vector<8x128xf32>
    %470 = vector.broadcast %cst_109 : f32 to vector<8x128xf32>
    %471 = arith.select %468, %469, %470 : vector<8x128xi1>, vector<8x128xf32>
    %472 = arith.addf %466, %471 : vector<8x128xf32>
    %c0_110 = arith.constant 0 : index
    %c0_111 = arith.constant 0 : index
    %c0_112 = arith.constant 0 : index
    %473 = vector.load %arg5[%c0_110, %c0_111, %c0_112] : memref<1x8x128xf32, #tpu.memory_space<vmem>>, vector<1x8x128xf32>
    %474 = vector.shape_cast %473 : vector<1x8x128xf32> to vector<8x128xf32>
    %475 = vector.shape_cast %472 : vector<8x128xf32> to vector<1x8x128xf32>
    tpu.vector_store %arg5[%c0_110, %c0_111, %c0_112], %475 {strides = array<i32>} : memref<1x8x128xf32, #tpu.memory_space<vmem>>, vector<1x8x128xf32>,
    return
  }
  func.func @transform_0(%arg0: i32) -> (i32, i32) {
    %c0_i32 = arith.constant 0 : i32
    %c0_i32_0 = arith.constant 0 : i32
    return %c0_i32, %arg0 : i32, i32
  }
  func.func @transform_1(%arg0: i32) -> (i32, i32) {
    %c0_i32 = arith.constant 0 : i32
    %c0_i32_0 = arith.constant 0 : i32
    %c0_i32_1 = arith.constant 0 : i32
    return %c0_i32, %c0_i32_0 : i32, i32
  }
  func.func @transform_2(%arg0: i32) -> (i32, i32, i32) {
    %c0_i32 = arith.constant 0 : i32
    %c0_i32_0 = arith.constant 0 : i32
    %c0_i32_1 = arith.constant 0 : i32
    return %c0_i32, %arg0, %c0_i32_0 : i32, i32, i32
  }
  func.func @transform_3(%arg0: i32) -> (i32, i32) {
    %c0_i32 = arith.constant 0 : i32
    %c0_i32_0 = arith.constant 0 : i32
    return %arg0, %c0_i32 : i32, i32
  }
  func.func @transform_4(%arg0: i32) -> (i32, i32, i32) {
    %c0_i32 = arith.constant 0 : i32
    %c0_i32_0 = arith.constant 0 : i32
    %c0_i32_1 = arith.constant 0 : i32
    return %arg0, %c0_i32, %c0_i32_0 : i32, i32, i32
  }
}

</mosaic_0001>

<llo_original>
// kernel: tpu_custom_call.1
$region0: #{tpu_custom_call.1}
  #allocation0 [shape = 'u32[]', space=smem, size = 0x4, offset = 0x4, fixed_abs, tag = 'smem constant byte address 0x4 - core index']
  #allocation1 [shape = 'u32[144,128]{1,0:T(1,128)}', space=vmem, size = 0x12000, scoped, tag = 'internal scratch']
  %s0 = inlined_call_operand.vmem [shape: f32[112,8], index: 0, kind: input, shape index: {}]
  %s1 = inlined_call_operand.vmem [shape: f32[8,3], index: 1, kind: input, shape index: {}]
  %s2 = inlined_call_operand.vmem [shape: bf16[2,8,256], index: 2, kind: input, shape index: {}]
  %s3 = inlined_call_operand.vmem [shape: bf16[8,256], index: 3, kind: input, shape index: {}]
  %s4 = inlined_call_operand.hbm [shape: f32[1,8,128], index: 4, kind: output, shape index: {}]
  %s5 = sld [smem:[#allocation0]]
  $region26: #{tpu_custom_call.1} parent=0
    _
  %s7 = ssub.s32 1, %s5
  %s8 = scalar_select 0, %s7, %s5
  $region1: #{tpu_custom_call.1} parent=0
    #allocation2 [shape = 'u8[4096]{0}', space=vmem, size = 0x1000, scoped, tag = 'output window, operand 0, single buffered']
    #allocation3 [shape = 's32[1]{0}', space=sflag, size = 0x4, scoped, tag = 'scoped memory for tpu_custom_call.1']
    %9 = vsyncpa [#allocation3], 0
    // Predicated region
    $region2: #{tpu_custom_call.1} parent=1 // pred_check
      _
    $region3: #{tpu_custom_call.1} parent=1 // pred_check_branch
      %11 = sbr.rel (0) target = $region5
    $region4: #{tpu_custom_call.1} parent=1 // pred_region
      _
    $region5: #{tpu_custom_call.1} parent=1 // pred_fallthru
      _
    // Predicated region
    $region6: #{tpu_custom_call.1} parent=1 // pred_check
      _
    $region7: #{tpu_custom_call.1} parent=1 // pred_check_branch
      %13 = sbr.rel (0) target = $region9
    $region8: #{tpu_custom_call.1} parent=1 // pred_region
      _
    $region9: #{tpu_custom_call.1} parent=1 // pred_fallthru
      _
    // Predicated region
    $region10: #{tpu_custom_call.1} parent=1 // pred_check
      _
    $region11: #{tpu_custom_call.1} parent=1 // pred_check_branch
      %15 = sbr.rel (0) target = $region13
    $region12: #{tpu_custom_call.1} parent=1 // pred_region
      _
    $region13: #{tpu_custom_call.1} parent=1 // pred_fallthru
      _
    // Predicated region
    $region14: #{tpu_custom_call.1} parent=1 // pred_check
      _
    $region15: #{tpu_custom_call.1} parent=1 // pred_check_branch
      %17 = sbr.rel (0) target = $region17
    $region16: #{tpu_custom_call.1} parent=1 // pred_region
      _
    $region17: #{tpu_custom_call.1} parent=1 // pred_fallthru
      _
    %v18 = vlaneseq
    %v19 = vand.u32 %v18, 127
    %s20 = smul.u32 0, 8
    %v21 = vstv %s20
    %v22 = vadd.s32 %v19, %v21
    %vm23 = vcmp.lt.s32.totalorder %v22, 8
    %v24 = vsel %vm23, 1, 0
    %v25 = vcvt.s32.f32 %v24
    %v26 = vlaneseq
    %v27 = vshrl.u32 %v26, 7
    %v28 = vadd.s32 %v27, %v21
    %vm29 = vcmp.lt.s32.totalorder %v28, 8
    %v30 = vsel %vm29, 1, 0
    %v31 = vcvt.s32.f32 %v30
    %v32 = vld [vmem:[%s2] sm:$0xff]
    %v33 = vunpack.c.l.bf16 %v32
    %v34 = vunpack.c.h.bf16 %v32
    %s35 = scalar_lea.vmem %s2, 8
    %v36 = vld [vmem:[%s35] sm:$0xff]
    %v37 = vunpack.c.l.bf16 %v36
    %v38 = vunpack.c.h.bf16 %v36
    %v39 = vld [vmem:[%s3] sm:$0xff]
    %v40 = vunpack.c.l.bf16 %v39
    %v41 = vunpack.c.h.bf16 %v39
    %v42 = vmul.f32 %v40, 2.0
    %v43 = vmul.f32 %v41, 2.0
    %v44 = vsub.f32 1.0, %v42
    %v45 = vsub.f32 1.0, %v43
    %v46 = vsub.f32 %v37, %v33
    %v47 = vsub.f32 %v38, %v34
    %v48 = vmul.f32 %v44, %v46
    %v49 = vmul.f32 %v45, %v47
    %v50 = vmax.f32 %v48, 0.0
    %v51 = vmax.f32 %v49, 0.0
    %v52 = vand.u32 2147483647, %v48
    %v53 = vand.u32 2147483647, %v49
    %v54 = vsub.f32 0.0, %v52
    %v55 = vsub.f32 0.0, %v53
    %v56 = vmul.f32 %v54, 1.442695
    %v57 = vpow.pop %v56
    %v58 = vmul.f32 %v55, 1.442695
    %v59 = vpow.pop %v58
    %v60 = vadd.f32 %v57, 1.0
    %v61 = vadd.f32 %v59, 1.0
    %v62 = vlog2.pop %v60
    %v63 = vmul.f32 %v62, 0.6931472
    %v64 = vlog2.pop %v61
    %v65 = vmul.f32 %v64, 0.6931472
    %v66 = vadd.f32 %v50, %v63
    %v67 = vadd.f32 %v51, %v65
    %v68 = vmul.f32 %v66, %v31
    %v69 = vmul.f32 %v67, %v31
    %v70 = vadd.f32 %v68, %v69
    %71 = vadd.xlane.f32.xlu0 %v70
    %v72 = vpop.xlane.xlu0 %71
    %v73 = vrot.slane %v72, 4
    %v74 = vadd.f32 %v72, %v73
    %v75 = vrot.slane %v74, 2
    %v76 = vadd.f32 %v74, %v75
    %v77 = vrot.slane %v76, 1
    %v78 = vadd.f32 %v76, %v77
    %s79 = vtos %v78
    %v80 = vld [vmem:[%s0] sm:$0x7]
    %v81 = vld [vmem:[%s0 + $0x3] sm:$0x7]
    %v82 = vld [vmem:[%s0 + $0x6] sm:$0x7]
    %v83 = vsub.f32 %v80, %v81
    %v84 = vand.u32 2147483647, %v83
    %vm85 = vcmask 59392
    %v86 = vsel %vm85, %v84, 0.0
    %v87 = vrot.slane %v86, 4
    %v88 = vadd.f32 %v86, %v87
    %v89 = vrot.slane %v88, 2
    %v90 = vadd.f32 %v88, %v89
    %v91 = vrot.slane %v90, 1
    %v92 = vadd.f32 %v90, %v91
    %v93 = vand.u32 2147483647, %v92
    %v94 = vmin.f32 %v93, 2.0
    %v95 = vmul.f32 %v94, 0.5
    %v96 = vmul.f32 %v95, %v94
    %v97 = vsub.f32 %v93, %v94
    %v98 = vmul.f32 %v97, 2.0
    %v99 = vadd.f32 %v96, %v98
    %v100 = vmul.f32 %v99, %v25
    %vm101 = vcmask 57344
    %v102 = vsel %vm101, %v100, 0.0
    %103 = vadd.xlane.f32.xlu0 %v102
    %v104 = vpop.xlane.xlu0 %103
    %v105 = vrot.slane %v104, 4
    %v106 = vadd.f32 %v104, %v105
    %v107 = vrot.slane %v106, 2
    %v108 = vadd.f32 %v106, %v107
    %v109 = vrot.slane %v108, 1
    %v110 = vadd.f32 %v108, %v109
    %s111 = vtos %v110
    %v112 = vsub.f32 %v80, %v82
    %v113 = vand.u32 2147483647, %v112
    %v114 = vsel %vm85, %v113, 0.0
    %v115 = vrot.slane %v114, 4
    %v116 = vadd.f32 %v114, %v115
    %v117 = vrot.slane %v116, 2
    %v118 = vadd.f32 %v116, %v117
    %v119 = vrot.slane %v118, 1
    %v120 = vadd.f32 %v118, %v119
    %v121 = vand.u32 2147483647, %v120
    %v122 = vmin.f32 %v121, 1.0
    %v123 = vmul.f32 %v122, 0.5
    %v124 = vmul.f32 %v123, %v122
    %v125 = vsub.f32 %v121, %v122
    %v126 = vadd.f32 %v124, %v125
    %v127 = vmul.f32 %v126, %v25
    %v128 = vsel %vm101, %v127, 0.0
    %129 = vadd.xlane.f32.xlu0 %v128
    %v130 = vpop.xlane.xlu0 %129
    %v131 = vrot.slane %v130, 4
    %v132 = vadd.f32 %v130, %v131
    %v133 = vrot.slane %v132, 2
    %v134 = vadd.f32 %v132, %v133
    %v135 = vrot.slane %v134, 1
    %v136 = vadd.f32 %v134, %v135
    %s137 = vtos %v136
    %v138 = vld [vmem:[%s0 + $0x9] sm:$0x1]
    %v139 = vld [vmem:[%s0 + $0xf] sm:$0xff]
    %v140 = vld [vmem:[%s0 + $0x17] sm:$0xf]
    %v141 = vadd.s32 %v27, 8
    %v142 = vcvt.s32.f32 %v27
    %v143 = vcvt.s32.f32 %v141
    %v144 = vlaneseq
    %v145 = vshrl.u32 %v144, 7
    %v146 = vsub.s32 0, %v145
    %v147 = vrot.slane %v138, %v146
    %vm148 = vcmp.eq.f32.partialorder %v142, %v147
    %vm149 = vcmp.eq.f32.partialorder %v143, %v147
    %v150 = vsel %vm148, 1, 0
    %v151 = vsel %vm149, 1, 0
    %v152 = vcvt.s32.f32 %v150
    %v153 = vcvt.s32.f32 %v151
    %vm154 = vcmask 64512
    %v155 = vsel %vm154, %v139, -inf
    %vm156 = vcmask 60416
    %v157 = vsel %vm156, %v140, -inf
    %v158 = vmax.f32 %v155, %v157
    %v159 = vrot.slane %v158, 4
    %v160 = vmax.f32 %v158, %v159
    %v161 = vrot.slane %v160, 2
    %v162 = vmax.f32 %v160, %v161
    %v163 = vrot.slane %v162, 1
    %v164 = vmax.f32 %v162, %v163
    %v165 = vsub.f32 %v139, %v164
    %v166 = vsub.f32 %v140, %v164
    %v167 = vmul.f32 %v165, 1.442695
    %v168 = vpow.pop %v167
    %v169 = vmul.f32 %v166, 1.442695
    %v170 = vpow.pop %v169
    %v171 = vsel %vm154, %v168, 0.0
    %v172 = vsel %vm156, %v170, 0.0
    %v173 = vadd.f32 %v171, %v172
    %v174 = vrot.slane %v173, 4
    %v175 = vadd.f32 %v173, %v174
    %v176 = vrot.slane %v175, 2
    %v177 = vadd.f32 %v175, %v176
    %v178 = vrot.slane %v177, 1
    %v179 = vadd.f32 %v177, %v178
    %v180 = vlog2.pop %v179
    %v181 = vmul.f32 %v180, 0.6931472
    %v182 = vadd.f32 %v164, %v181
    %v183 = vmul.f32 %v139, %v152
    %v184 = vmul.f32 %v140, %v153
    %v185 = vsel %vm154, %v183, 0.0
    %v186 = vsel %vm156, %v184, 0.0
    %v187 = vadd.f32 %v185, %v186
    %v188 = vrot.slane %v187, 4
    %v189 = vadd.f32 %v187, %v188
    %v190 = vrot.slane %v189, 2
    %v191 = vadd.f32 %v189, %v190
    %v192 = vrot.slane %v191, 1
    %v193 = vadd.f32 %v191, %v192
    %v194 = vsub.f32 %v182, %v193
    %v195 = vmul.f32 %v194, %v25
    %v196 = vsel %vm101, %v195, 0.0
    %197 = vadd.xlane.f32.xlu0 %v196
    %v198 = vpop.xlane.xlu0 %197
    %v199 = vrot.slane %v198, 4
    %v200 = vadd.f32 %v198, %v199
    %v201 = vrot.slane %v200, 2
    %v202 = vadd.f32 %v200, %v201
    %v203 = vrot.slane %v202, 1
    %v204 = vadd.f32 %v202, %v203
    %s205 = vtos %v204
    %v206 = vld [vmem:[%s0 + $0xa] sm:$0x1]
    %v207 = vld [vmem:[%s0 + $0x1b] sm:$0xff]
    %v208 = vld [vmem:[%s0 + $0x23] sm:$0xf]
    %v209 = vmul.f32 %v207, %v152
    %v210 = vmul.f32 %v208, %v153
    %v211 = vsel %vm154, %v209, 0.0
    %v212 = vsel %vm156, %v210, 0.0
    %v213 = vadd.f32 %v211, %v212
    %v214 = vrot.slane %v213, 4
    %v215 = vadd.f32 %v213, %v214
    %v216 = vrot.slane %v215, 2
    %v217 = vadd.f32 %v215, %v216
    %v218 = vrot.slane %v217, 1
    %v219 = vadd.f32 %v217, %v218
    %v220 = vmul.f32 %v206, 3.8197186
    %v221 = vsub.f32 %v219, %v220
    %v222 = vand.u32 2147483647, %v221
    %v223 = vmin.f32 %v222, 1.0
    %v224 = vmul.f32 %v223, 0.5
    %v225 = vmul.f32 %v224, %v223
    %v226 = vsub.f32 %v222, %v223
    %v227 = vadd.f32 %v225, %v226
    %v228 = vmul.f32 %v227, %v25
    %v229 = vsel %vm101, %v228, 0.0
    %230 = vadd.xlane.f32.xlu0 %v229
    %v231 = vpop.xlane.xlu0 %230
    %v232 = vrot.slane %v231, 4
    %v233 = vadd.f32 %v231, %v232
    %v234 = vrot.slane %v233, 2
    %v235 = vadd.f32 %v233, %v234
    %v236 = vrot.slane %v235, 1
    %v237 = vadd.f32 %v235, %v236
    %s238 = vtos %v237
    %v239 = vld [vmem:[%s0 + $0xb] sm:$0x1]
    %v240 = vld [vmem:[%s0 + $0x33] sm:$0xff]
    %v241 = vlaneseq
    %v242 = vshrl.u32 %v241, 7
    %v243 = vsub.s32 0, %v242
    %v244 = vrot.slane %v239, %v243
    %vm245 = vcmp.eq.f32.partialorder %v142, %v244
    %v246 = vsel %vm245, 1, 0
    %v247 = vcvt.s32.f32 %v246
    %v248 = vsel %vm154, %v240, -inf
    %v249 = vrot.slane %v248, 4
    %v250 = vmax.f32 %v248, %v249
    %v251 = vrot.slane %v250, 2
    %v252 = vmax.f32 %v250, %v251
    %v253 = vrot.slane %v252, 1
    %v254 = vmax.f32 %v252, %v253
    %v255 = vsub.f32 %v240, %v254
    %v256 = vmul.f32 %v255, 1.442695
    %v257 = vpow.pop %v256
    %v258 = vsel %vm154, %v257, 0.0
    %v259 = vrot.slane %v258, 4
    %v260 = vadd.f32 %v258, %v259
    %v261 = vrot.slane %v260, 2
    %v262 = vadd.f32 %v260, %v261
    %v263 = vrot.slane %v262, 1
    %v264 = vadd.f32 %v262, %v263
    %v265 = vlog2.pop %v264
    %v266 = vmul.f32 %v265, 0.6931472
    %v267 = vadd.f32 %v254, %v266
    %v268 = vmul.f32 %v240, %v247
    %v269 = vsel %vm154, %v268, 0.0
    %v270 = vrot.slane %v269, 4
    %v271 = vadd.f32 %v269, %v270
    %v272 = vrot.slane %v271, 2
    %v273 = vadd.f32 %v271, %v272
    %v274 = vrot.slane %v273, 1
    %v275 = vadd.f32 %v273, %v274
    %v276 = vsub.f32 %v267, %v275
    %v277 = vmul.f32 %v276, %v25
    %v278 = vsel %vm101, %v277, 0.0
    %279 = vadd.xlane.f32.xlu0 %v278
    %v280 = vpop.xlane.xlu0 %279
    %v281 = vrot.slane %v280, 4
    %v282 = vadd.f32 %v280, %v281
    %v283 = vrot.slane %v282, 2
    %v284 = vadd.f32 %v282, %v283
    %v285 = vrot.slane %v284, 1
    %v286 = vadd.f32 %v284, %v285
    %s287 = vtos %v286
    %v288 = vld [vmem:[%s1] sm:$0xff]
    %290 = vset.pattern.permute.xlu0 0
    %291 = vperm.xlu0 %290, %v288
    %v292 = vpop.permute.xlu0 %291
    %v294 = vmul.f32 %v247, %v292
    %v295 = vsel %vm154, %v294, 0.0
    %v296 = vrot.slane %v295, 4
    %v297 = vadd.f32 %v295, %v296
    %v298 = vrot.slane %v297, 2
    %v299 = vadd.f32 %v297, %v298
    %v300 = vrot.slane %v299, 1
    %v301 = vadd.f32 %v299, %v300
    %302 = vset.pattern.permute.xlu0 1
    %303 = vperm.xlu0 %302, %v288
    %v304 = vpop.permute.xlu0 %303
    %v306 = vmul.f32 %v247, %v304
    %v307 = vsel %vm154, %v306, 0.0
    %v308 = vrot.slane %v307, 4
    %v309 = vadd.f32 %v307, %v308
    %v310 = vrot.slane %v309, 2
    %v311 = vadd.f32 %v309, %v310
    %v312 = vrot.slane %v311, 1
    %v313 = vadd.f32 %v311, %v312
    %314 = vset.pattern.permute.xlu0 2
    %315 = vperm.xlu0 %314, %v288
    %v316 = vpop.permute.xlu0 %315
    %v318 = vmul.f32 %v247, %v316
    %v319 = vsel %vm154, %v318, 0.0
    %v320 = vrot.slane %v319, 4
    %v321 = vadd.f32 %v319, %v320
    %v322 = vrot.slane %v321, 2
    %v323 = vadd.f32 %v321, %v322
    %v324 = vrot.slane %v323, 1
    %v325 = vadd.f32 %v323, %v324
    %v326 = vld [vmem:[%s0 + $0x3b] sm:$0xff]
    %v327 = vmul.f32 %v247, %v326
    %v328 = vsel %vm154, %v327, 0.0
    %v329 = vrot.slane %v328, 4
    %v330 = vadd.f32 %v328, %v329
    %v331 = vrot.slane %v330, 2
    %v332 = vadd.f32 %v330, %v331
    %v333 = vrot.slane %v332, 1
    %v334 = vadd.f32 %v332, %v333
    %v335 = vld [vmem:[%s0 + $0x43] sm:$0xff]
    %v336 = vmul.f32 %v247, %v335
    %v337 = vsel %vm154, %v336, 0.0
    %v338 = vrot.slane %v337, 4
    %v339 = vadd.f32 %v337, %v338
    %v340 = vrot.slane %v339, 2
    %v341 = vadd.f32 %v339, %v340
    %v342 = vrot.slane %v341, 1
    %v343 = vadd.f32 %v341, %v342
    %v344 = vld [vmem:[%s0 + $0x4b] sm:$0xff]
    %v345 = vmul.f32 %v247, %v344
    %v346 = vsel %vm154, %v345, 0.0
    %v347 = vrot.slane %v346, 4
    %v348 = vadd.f32 %v346, %v347
    %v349 = vrot.slane %v348, 2
    %v350 = vadd.f32 %v348, %v349
    %v351 = vrot.slane %v350, 1
    %v352 = vadd.f32 %v350, %v351
    %v353 = vld [vmem:[%s0 + $0xc] sm:$0x7]
    %v354 = vrcp.pop %v301
    %v355 = vmul.f32 %v353, %v354
    %v356 = vrcp.pop %v313
    %v357 = vmul.f32 %v353, %v356
    %v358 = vrcp.pop %v325
    %v359 = vmul.f32 %v353, %v358
    %v360 = vsub.f32 %v355, %v334
    %v361 = vand.u32 2147483647, %v360
    %v362 = vsub.f32 %v357, %v343
    %v363 = vand.u32 2147483647, %v362
    %v365 = vrot.slane %v363, 1
    %v367 = vadd.f32 %v361, %v365
    %v368 = vsub.f32 %v359, %v352
    %v369 = vand.u32 2147483647, %v368
    %v371 = vrot.slane %v369, 2
    %v373 = vadd.f32 %v367, %v371
    %v374 = vand.u32 2147483647, %v373
    %v375 = vmin.f32 %v374, 1.0
    %v376 = vmul.f32 %v375, 0.5
    %v377 = vmul.f32 %v376, %v375
    %v378 = vsub.f32 %v374, %v375
    %v379 = vadd.f32 %v377, %v378
    %v380 = vmul.f32 %v379, %v25
    %v381 = vsel %vm101, %v380, 0.0
    %382 = vadd.xlane.f32.xlu0 %v381
    %v383 = vpop.xlane.xlu0 %382
    %v384 = vrot.slane %v383, 4
    %v385 = vadd.f32 %v383, %v384
    %v386 = vrot.slane %v385, 2
    %v387 = vadd.f32 %v385, %v386
    %v388 = vrot.slane %v387, 1
    %v389 = vadd.f32 %v387, %v388
    %s390 = vtos %v389
    %v391 = vmul.f32 %v142, 0.5235988
    %v392 = vmul.f32 %v143, 0.5235988
    %v393 = vld [vmem:[%s0 + $0x27] sm:$0xff]
    %v394 = vld [vmem:[%s0 + $0x2f] sm:$0xf]
    %v395 = vadd.f32 %v393, %v391
    %v396 = vadd.f32 %v394, %v392
    %v397 = vmul.f32 %v152, %v395
    %v398 = vmul.f32 %v153, %v396
    %v399 = vsel %vm154, %v397, 0.0
    %v400 = vsel %vm156, %v398, 0.0
    %v401 = vadd.f32 %v399, %v400
    %v402 = vrot.slane %v401, 4
    %v403 = vadd.f32 %v401, %v402
    %v404 = vrot.slane %v403, 2
    %v405 = vadd.f32 %v403, %v404
    %v406 = vrot.slane %v405, 1
    %v407 = vadd.f32 %v405, %v406
    %v408 = vmul.f32 %v152, %v391
    %v409 = vmul.f32 %v153, %v392
    %v410 = vsel %vm154, %v408, 0.0
    %v411 = vsel %vm156, %v409, 0.0
    %v412 = vadd.f32 %v410, %v411
    %v413 = vrot.slane %v412, 4
    %v414 = vadd.f32 %v412, %v413
    %v415 = vrot.slane %v414, 2
    %v416 = vadd.f32 %v414, %v415
    %v417 = vrot.slane %v416, 1
    %v418 = vadd.f32 %v416, %v417
    %v419 = vadd.f32 %v206, %v418
    %v420 = vld [vmem:[%s0 + $0x53] sm:$0xff]
    %v421 = vadd.f32 %v292, %v420
    %v422 = vmul.f32 %v247, %v421
    %v423 = vsel %vm154, %v422, 0.0
    %v424 = vrot.slane %v423, 4
    %v425 = vadd.f32 %v423, %v424
    %v426 = vrot.slane %v425, 2
    %v427 = vadd.f32 %v425, %v426
    %v428 = vrot.slane %v427, 1
    %v429 = vadd.f32 %v427, %v428
    %v430 = vld [vmem:[%s0 + $0x5b] sm:$0xff]
    %v431 = vadd.f32 %v304, %v430
    %v432 = vmul.f32 %v247, %v431
    %v433 = vsel %vm154, %v432, 0.0
    %v434 = vrot.slane %v433, 4
    %v435 = vadd.f32 %v433, %v434
    %v436 = vrot.slane %v435, 2
    %v437 = vadd.f32 %v435, %v436
    %v438 = vrot.slane %v437, 1
    %v439 = vadd.f32 %v437, %v438
    %v440 = vld [vmem:[%s0 + $0x63] sm:$0xff]
    %v441 = vadd.f32 %v316, %v440
    %v442 = vmul.f32 %v247, %v441
    %v443 = vsel %vm154, %v442, 0.0
    %v444 = vrot.slane %v443, 4
    %v445 = vadd.f32 %v443, %v444
    %v446 = vrot.slane %v445, 2
    %v447 = vadd.f32 %v445, %v446
    %v448 = vrot.slane %v447, 1
    %v449 = vadd.f32 %v447, %v448
    %v450 = vadd.f32 %v301, %v353
    %v451 = vadd.f32 %v313, %v353
    %v452 = vadd.f32 %v325, %v353
    %v453 = vand.u32 %v27, 3
    %vm454 = vcmp.lt.s32.totalorder %v453, 2
    %v455 = vsel %vm454, 1.0, -1.0
    %vm456 = vcmp.lt.s32.totalorder %v27, 4
    %v457 = vsel %vm456, 1.0, -1.0
    %vm458 = vcmp.eq.s32.totalorder %v453, 0
    %vm459 = vcmp.eq.s32.totalorder %v453, 3
    %vm460 = vmor %vm458, %vm459
    %v461 = vsel %vm460, 1.0, -1.0
    %v462 = vmul.f32 %v429, 0.5
    %v463 = vmul.f32 %v462, %v455
    %v464 = vmul.f32 %v449, 0.5
    %v465 = vmul.f32 %v464, %v457
    %v466 = vmul.f32 %v439, 0.5
    %v467 = vmul.f32 %v466, %v461
    %v468 = vand.u32 2147483647, %v407
    %vm469 = vcmp.le.f32.partialorder %v468, 0.7853982
    %vm470 = vcmp.lt.s32.totalorder %v407, 0
    %v471 = vand.u32 %v407, 2139095040
    %v472 = vshrl.u32 %v471, 23
    %v473 = vsub.s32 %v472, 127
    %v474 = vand.u32 2147483647, %v407
    %v475 = vand.u32 %v474, 8388607
    %v476 = vor.u32 %v475, 8388608
    %v477 = vsub.s32 0, %v476
    %v478 = vadd.s32 %v473, 1
    %vm479 = vcmp.gt.s32.totalorder %v478, 0
    %v480 = vsel %vm479, %v478, 0
    %v481 = vshrl.u32 %v480, 5
    %v482 = vand.u32 %v480, 31
    %v483 = vsub.s32 32, %v482
    %v484 = vshrl.u32 683565275, %v483
    %v485 = vshll.u32 683565275, %v482
    %v486 = vshrl.u32 2475754826, %v483
    %v487 = vor.u32 %v485, %v486
    %v488 = vshll.u32 2475754826, %v482
    %v489 = vshrl.u32 2131351028, %v483
    %v490 = vor.u32 %v488, %v489
    %v491 = vshll.u32 2131351028, %v482
    %v492 = vshrl.u32 2102212464, %v483
    %v493 = vor.u32 %v491, %v492
    %v494 = vshll.u32 2102212464, %v482
    %v495 = vshrl.u32 920167782, %v483
    %v496 = vor.u32 %v494, %v495
    %v497 = vshll.u32 920167782, %v482
    %v498 = vshrl.u32 1326507024, %v483
    %v499 = vor.u32 %v497, %v498
    %vm500 = vcmp.lt.s32.totalorder %v481, 1
    %vm501 = vcmp.lt.s32.totalorder %v481, 2
    %vm502 = vcmp.lt.s32.totalorder %v481, 3
    %vm503 = vcmp.lt.s32.totalorder %v481, 4
    %v504 = vsel %vm500, %v484, %v487
    %v505 = vsel %vm503, %v493, 2102212464
    %v506 = vsel %vm502, %v490, %v505
    %v507 = vsel %vm501, %v504, %v506
    %v508 = vsel %vm500, %v487, %v490
    %v509 = vsel %vm503, %v496, 920167782
    %v510 = vsel %vm502, %v493, %v509
    %v511 = vsel %vm501, %v508, %v510
    %v512 = vsel %vm500, %v490, %v493
    %v513 = vsel %vm503, %v499, 1326507024
    %v514 = vsel %vm502, %v496, %v513
    %v515 = vsel %vm501, %v512, %v514
    %v516 = vshll.u32 %v476, 8
    %v517 = vmul.u32.u64.compose %v516, %v515
    %v518 = vextract.low.u32 %v517
    %v519 = vextract.high.u32 %v517
    %v520 = vmul.u32.u64.compose %v516, %v511
    %v521 = vextract.low.u32 %v520
    %v522 = vextract.high.u32 %v520
    %v523 = vmul.u32 %v516, %v507
    %v524 = vadd.s32 %v519, %v521
    %vm525 = vc.u32 %v519, %v521
    %v526 = vadd.s32 %v522, 1
    %v527 = vsel %vm525, %v526, %v522
    %v528 = vadd.s32 %v523, %v527
    %v529 = vadd.s32 %v528, 536870912
    %v530 = vshrl.u32 %v529, 30
    %v531 = vshll.u32 %v530, 30
    %v532 = vsub.s32 %v528, %v531
    %vm533 = vcmp.lt.s32.totalorder %v532, 0
    %v534 = vsub.s32 0, %v532
    %v535 = vsel %vm533, %v534, %v532
    %v536 = vclz %v535
    %v537 = vsub.s32 %v536, 2
    %vm538 = vcmp.gt.s32.totalorder 0, %v537
    %v539 = vsel %vm538, 0, %v537
    %v540 = vsub.s32 32, %v539
    %v541 = vshll.u32 %v532, %v539
    %v542 = vshrl.u32 %v524, %v540
    %v543 = vor.u32 %v541, %v542
    %v544 = vsub.s32 4294967266, %v539
    %v545 = vadd.s32 %v544, 127
    %v546 = vshll.u32 %v545, 23
    %v547 = vor.u32 4788187, %v546
    %v548 = vand.u32 2147483647, %v547
    %v550 = vcvt.s32.f32 %v543
    %v551 = vmul.f32 %v550, %v548
    %v552 = vxor.u32 %v551, 2147483648
    %v553 = vsel %vm470, %v552, %v551
    %v554 = vsub.s32 4, %v530
    %v555 = vsel %vm470, %v554, %v530
    %v556 = vsel %vm469, %v407, %v553
    %v557 = vsel %vm469, 0, %v555
    %v558 = vcosq.f32.pop %v556
    %v559 = vsinq.f32.pop %v556
    %vm560 = vweird.f32 %v407
    %v561 = vand.u32 %v557, 3
    %vm562 = vcmp.lt.s32.totalorder %v561, 2
    %vm563 = vcmp.eq.s32.totalorder %v561, 0
    %v564 = vxor.u32 %v559, 2147483648
    %v565 = vsel %vm563, %v558, %v564
    %vm566 = vcmp.eq.s32.totalorder %v561, 2
    %v567 = vxor.u32 %v558, 2147483648
    %v568 = vsel %vm566, %v567, %v559
    %v569 = vsel %vm562, %v565, %v568
    %v570 = vsel %vm560, nan, %v569
    %v571 = vand.u32 2147483647, %v407
    %vm572 = vcmp.le.f32.partialorder %v571, 0.7853982
    %vm573 = vcmp.lt.s32.totalorder %v407, 0
    %v574 = vand.u32 %v407, 2139095040
    %v575 = vshrl.u32 %v574, 23
    %v576 = vsub.s32 %v575, 127
    %v577 = vand.u32 2147483647, %v407
    %v578 = vand.u32 %v577, 8388607
    %v579 = vor.u32 %v578, 8388608
    %v580 = vsub.s32 0, %v579
    %v581 = vadd.s32 %v576, 1
    %vm582 = vcmp.gt.s32.totalorder %v581, 0
    %v583 = vsel %vm582, %v581, 0
    %v584 = vshrl.u32 %v583, 5
    %v585 = vand.u32 %v583, 31
    %v586 = vsub.s32 32, %v585
    %v587 = vshrl.u32 683565275, %v586
    %v588 = vshll.u32 683565275, %v585
    %v589 = vshrl.u32 2475754826, %v586
    %v590 = vor.u32 %v588, %v589
    %v591 = vshll.u32 2475754826, %v585
    %v592 = vshrl.u32 2131351028, %v586
    %v593 = vor.u32 %v591, %v592
    %v594 = vshll.u32 2131351028, %v585
    %v595 = vshrl.u32 2102212464, %v586
    %v596 = vor.u32 %v594, %v595
    %v597 = vshll.u32 2102212464, %v585
    %v598 = vshrl.u32 920167782, %v586
    %v599 = vor.u32 %v597, %v598
    %v600 = vshll.u32 920167782, %v585
    %v601 = vshrl.u32 1326507024, %v586
    %v602 = vor.u32 %v600, %v601
    %vm603 = vcmp.lt.s32.totalorder %v584, 1
    %vm604 = vcmp.lt.s32.totalorder %v584, 2
    %vm605 = vcmp.lt.s32.totalorder %v584, 3
    %vm606 = vcmp.lt.s32.totalorder %v584, 4
    %v607 = vsel %vm603, %v587, %v590
    %v608 = vsel %vm606, %v596, 2102212464
    %v609 = vsel %vm605, %v593, %v608
    %v610 = vsel %vm604, %v607, %v609
    %v611 = vsel %vm603, %v590, %v593
    %v612 = vsel %vm606, %v599, 920167782
    %v613 = vsel %vm605, %v596, %v612
    %v614 = vsel %vm604, %v611, %v613
    %v615 = vsel %vm603, %v593, %v596
    %v616 = vsel %vm606, %v602, 1326507024
    %v617 = vsel %vm605, %v599, %v616
    %v618 = vsel %vm604, %v615, %v617
    %v619 = vshll.u32 %v579, 8
    %v620 = vmul.u32.u64.compose %v619, %v618
    %v621 = vextract.low.u32 %v620
    %v622 = vextract.high.u32 %v620
    %v623 = vmul.u32.u64.compose %v619, %v614
    %v624 = vextract.low.u32 %v623
    %v625 = vextract.high.u32 %v623
    %v626 = vmul.u32 %v619, %v610
    %v627 = vadd.s32 %v622, %v624
    %vm628 = vc.u32 %v622, %v624
    %v629 = vadd.s32 %v625, 1
    %v630 = vsel %vm628, %v629, %v625
    %v631 = vadd.s32 %v626, %v630
    %v632 = vadd.s32 %v631, 536870912
    %v633 = vshrl.u32 %v632, 30
    %v634 = vshll.u32 %v633, 30
    %v635 = vsub.s32 %v631, %v634
    %vm636 = vcmp.lt.s32.totalorder %v635, 0
    %v637 = vsub.s32 0, %v635
    %v638 = vsel %vm636, %v637, %v635
    %v639 = vclz %v638
    %v640 = vsub.s32 %v639, 2
    %vm641 = vcmp.gt.s32.totalorder 0, %v640
    %v642 = vsel %vm641, 0, %v640
    %v643 = vsub.s32 32, %v642
    %v644 = vshll.u32 %v635, %v642
    %v645 = vshrl.u32 %v627, %v643
    %v646 = vor.u32 %v644, %v645
    %v647 = vsub.s32 4294967266, %v642
    %v648 = vadd.s32 %v647, 127
    %v649 = vshll.u32 %v648, 23
    %v650 = vor.u32 4788187, %v649
    %v651 = vand.u32 2147483647, %v650
    %v653 = vcvt.s32.f32 %v646
    %v654 = vmul.f32 %v653, %v651
    %v655 = vxor.u32 %v654, 2147483648
    %v656 = vsel %vm573, %v655, %v654
    %v657 = vsub.s32 4, %v633
    %v658 = vsel %vm573, %v657, %v633
    %v659 = vsel %vm572, %v407, %v656
    %v660 = vsel %vm572, 0, %v658
    %v661 = vcosq.f32.pop %v659
    %v662 = vsinq.f32.pop %v659
    %vm663 = vweird.f32 %v407
    %v664 = vadd.s32 %v660, 3
    %v665 = vand.u32 %v664, 3
    %vm666 = vcmp.lt.s32.totalorder %v665, 2
    %vm667 = vcmp.eq.s32.totalorder %v665, 0
    %v668 = vxor.u32 %v662, 2147483648
    %v669 = vsel %vm667, %v661, %v668
    %vm670 = vcmp.eq.s32.totalorder %v665, 2
    %v671 = vxor.u32 %v661, 2147483648
    %v672 = vsel %vm670, %v671, %v662
    %v673 = vsel %vm666, %v669, %v672
    %v674 = vsel %vm663, nan, %v673
    %v675 = vmul.f32 %v570, %v463
    %v676 = vmul.f32 %v674, %v467
    %v677 = vadd.f32 %v675, %v676
    %v678 = vlaneseq
    %v679 = vshrl.u32 %v678, 7
    %v680 = vsub.s32 0, %v679
    %v681 = vrot.slane %v81, %v680
    %v682 = vadd.f32 %v677, %v681
    %v683 = vlaneseq
    %v684 = vshrl.u32 %v683, 7
    %v685 = vsub.s32 1, %v684
    %v686 = vrot.slane %v81, %v685
    %v687 = vadd.f32 %v465, %v686
    %v688 = vsub.f32 0.0, %v674
    %v689 = vmul.f32 %v688, %v463
    %v690 = vmul.f32 %v570, %v467
    %v691 = vadd.f32 %v689, %v690
    %v692 = vlaneseq
    %v693 = vshrl.u32 %v692, 7
    %v694 = vsub.s32 2, %v693
    %v695 = vrot.slane %v81, %v694
    %v696 = vadd.f32 %v691, %v695
    %v697 = vmul.f32 %v450, 0.5
    %v698 = vlaneseq
    %v699 = vshrl.u32 %v698, 7
    %v700 = vsub.s32 0, %v699
    %v701 = vrot.slane %v697, %v700
    %v702 = vmul.f32 %v701, %v455
    %v703 = vmul.f32 %v452, 0.5
    %v704 = vlaneseq
    %v705 = vshrl.u32 %v704, 7
    %v706 = vsub.s32 2, %v705
    %v707 = vrot.slane %v703, %v706
    %v708 = vmul.f32 %v707, %v457
    %v709 = vmul.f32 %v451, 0.5
    %v710 = vlaneseq
    %v711 = vshrl.u32 %v710, 7
    %v712 = vsub.s32 1, %v711
    %v713 = vrot.slane %v709, %v712
    %v714 = vmul.f32 %v713, %v461
    %v715 = vand.u32 2147483647, %v419
    %vm716 = vcmp.le.f32.partialorder %v715, 0.7853982
    %vm717 = vcmp.lt.s32.totalorder %v419, 0
    %v718 = vand.u32 %v419, 2139095040
    %v719 = vshrl.u32 %v718, 23
    %v720 = vsub.s32 %v719, 127
    %v721 = vand.u32 2147483647, %v419
    %v722 = vand.u32 %v721, 8388607
    %v723 = vor.u32 %v722, 8388608
    %v724 = vsub.s32 0, %v723
    %v725 = vadd.s32 %v720, 1
    %vm726 = vcmp.gt.s32.totalorder %v725, 0
    %v727 = vsel %vm726, %v725, 0
    %v728 = vshrl.u32 %v727, 5
    %v729 = vand.u32 %v727, 31
    %v730 = vsub.s32 32, %v729
    %v731 = vshrl.u32 683565275, %v730
    %v732 = vshll.u32 683565275, %v729
    %v733 = vshrl.u32 2475754826, %v730
    %v734 = vor.u32 %v732, %v733
    %v735 = vshll.u32 2475754826, %v729
    %v736 = vshrl.u32 2131351028, %v730
    %v737 = vor.u32 %v735, %v736
    %v738 = vshll.u32 2131351028, %v729
    %v739 = vshrl.u32 2102212464, %v730
    %v740 = vor.u32 %v738, %v739
    %v741 = vshll.u32 2102212464, %v729
    %v742 = vshrl.u32 920167782, %v730
    %v743 = vor.u32 %v741, %v742
    %v744 = vshll.u32 920167782, %v729
    %v745 = vshrl.u32 1326507024, %v730
    %v746 = vor.u32 %v744, %v745
    %vm747 = vcmp.lt.s32.totalorder %v728, 1
    %vm748 = vcmp.lt.s32.totalorder %v728, 2
    %vm749 = vcmp.lt.s32.totalorder %v728, 3
    %vm750 = vcmp.lt.s32.totalorder %v728, 4
    %v751 = vsel %vm747, %v731, %v734
    %v752 = vsel %vm750, %v740, 2102212464
    %v753 = vsel %vm749, %v737, %v752
    %v754 = vsel %vm748, %v751, %v753
    %v755 = vsel %vm747, %v734, %v737
    %v756 = vsel %vm750, %v743, 920167782
    %v757 = vsel %vm749, %v740, %v756
    %v758 = vsel %vm748, %v755, %v757
    %v759 = vsel %vm747, %v737, %v740
    %v760 = vsel %vm750, %v746, 1326507024
    %v761 = vsel %vm749, %v743, %v760
    %v762 = vsel %vm748, %v759, %v761
    %v763 = vshll.u32 %v723, 8
    %v764 = vmul.u32.u64.compose %v763, %v762
    %v765 = vextract.low.u32 %v764
    %v766 = vextract.high.u32 %v764
    %v767 = vmul.u32.u64.compose %v763, %v758
    %v768 = vextract.low.u32 %v767
    %v769 = vextract.high.u32 %v767
    %v770 = vmul.u32 %v763, %v754
    %v771 = vadd.s32 %v766, %v768
    %vm772 = vc.u32 %v766, %v768
    %v773 = vadd.s32 %v769, 1
    %v774 = vsel %vm772, %v773, %v769
    %v775 = vadd.s32 %v770, %v774
    %v776 = vadd.s32 %v775, 536870912
    %v777 = vshrl.u32 %v776, 30
    %v778 = vshll.u32 %v777, 30
    %v779 = vsub.s32 %v775, %v778
    %vm780 = vcmp.lt.s32.totalorder %v779, 0
    %v781 = vsub.s32 0, %v779
    %v782 = vsel %vm780, %v781, %v779
    %v783 = vclz %v782
    %v784 = vsub.s32 %v783, 2
    %vm785 = vcmp.gt.s32.totalorder 0, %v784
    %v786 = vsel %vm785, 0, %v784
    %v787 = vsub.s32 32, %v786
    %v788 = vshll.u32 %v779, %v786
    %v789 = vshrl.u32 %v771, %v787
    %v790 = vor.u32 %v788, %v789
    %v791 = vsub.s32 4294967266, %v786
    %v792 = vadd.s32 %v791, 127
    %v793 = vshll.u32 %v792, 23
    %v794 = vor.u32 4788187, %v793
    %v795 = vand.u32 2147483647, %v794
    %v797 = vcvt.s32.f32 %v790
    %v798 = vmul.f32 %v797, %v795
    %v799 = vxor.u32 %v798, 2147483648
    %v800 = vsel %vm717, %v799, %v798
    %v801 = vsub.s32 4, %v777
    %v802 = vsel %vm717, %v801, %v777
    %v803 = vsel %vm716, %v419, %v800
    %v804 = vsel %vm716, 0, %v802
    %v805 = vcosq.f32.pop %v803
    %v806 = vsinq.f32.pop %v803
    %vm807 = vweird.f32 %v419
    %v808 = vand.u32 %v804, 3
    %vm809 = vcmp.lt.s32.totalorder %v808, 2
    %vm810 = vcmp.eq.s32.totalorder %v808, 0
    %v811 = vxor.u32 %v806, 2147483648
    %v812 = vsel %vm810, %v805, %v811
    %vm813 = vcmp.eq.s32.totalorder %v808, 2
    %v814 = vxor.u32 %v805, 2147483648
    %v815 = vsel %vm813, %v814, %v806
    %v816 = vsel %vm809, %v812, %v815
    %v817 = vsel %vm807, nan, %v816
    %v818 = vand.u32 2147483647, %v419
    %vm819 = vcmp.le.f32.partialorder %v818, 0.7853982
    %vm820 = vcmp.lt.s32.totalorder %v419, 0
    %v821 = vand.u32 %v419, 2139095040
    %v822 = vshrl.u32 %v821, 23
    %v823 = vsub.s32 %v822, 127
    %v824 = vand.u32 2147483647, %v419
    %v825 = vand.u32 %v824, 8388607
    %v826 = vor.u32 %v825, 8388608
    %v827 = vsub.s32 0, %v826
    %v828 = vadd.s32 %v823, 1
    %vm829 = vcmp.gt.s32.totalorder %v828, 0
    %v830 = vsel %vm829, %v828, 0
    %v831 = vshrl.u32 %v830, 5
    %v832 = vand.u32 %v830, 31
    %v833 = vsub.s32 32, %v832
    %v834 = vshrl.u32 683565275, %v833
    %v835 = vshll.u32 683565275, %v832
    %v836 = vshrl.u32 2475754826, %v833
    %v837 = vor.u32 %v835, %v836
    %v838 = vshll.u32 2475754826, %v832
    %v839 = vshrl.u32 2131351028, %v833
    %v840 = vor.u32 %v838, %v839
    %v841 = vshll.u32 2131351028, %v832
    %v842 = vshrl.u32 2102212464, %v833
    %v843 = vor.u32 %v841, %v842
    %v844 = vshll.u32 2102212464, %v832
    %v845 = vshrl.u32 920167782, %v833
    %v846 = vor.u32 %v844, %v845
    %v847 = vshll.u32 920167782, %v832
    %v848 = vshrl.u32 1326507024, %v833
    %v849 = vor.u32 %v847, %v848
    %vm850 = vcmp.lt.s32.totalorder %v831, 1
    %vm851 = vcmp.lt.s32.totalorder %v831, 2
    %vm852 = vcmp.lt.s32.totalorder %v831, 3
    %vm853 = vcmp.lt.s32.totalorder %v831, 4
    %v854 = vsel %vm850, %v834, %v837
    %v855 = vsel %vm853, %v843, 2102212464
    %v856 = vsel %vm852, %v840, %v855
    %v857 = vsel %vm851, %v854, %v856
    %v858 = vsel %vm850, %v837, %v840
    %v859 = vsel %vm853, %v846, 920167782
    %v860 = vsel %vm852, %v843, %v859
    %v861 = vsel %vm851, %v858, %v860
    %v862 = vsel %vm850, %v840, %v843
    %v863 = vsel %vm853, %v849, 1326507024
    %v864 = vsel %vm852, %v846, %v863
    %v865 = vsel %vm851, %v862, %v864
    %v866 = vshll.u32 %v826, 8
    %v867 = vmul.u32.u64.compose %v866, %v865
    %v868 = vextract.low.u32 %v867
    %v869 = vextract.high.u32 %v867
    %v870 = vmul.u32.u64.compose %v866, %v861
    %v871 = vextract.low.u32 %v870
    %v872 = vextract.high.u32 %v870
    %v873 = vmul.u32 %v866, %v857
    %v874 = vadd.s32 %v869, %v871
    %vm875 = vc.u32 %v869, %v871
    %v876 = vadd.s32 %v872, 1
    %v877 = vsel %vm875, %v876, %v872
    %v878 = vadd.s32 %v873, %v877
    %v879 = vadd.s32 %v878, 536870912
    %v880 = vshrl.u32 %v879, 30
    %v881 = vshll.u32 %v880, 30
    %v882 = vsub.s32 %v878, %v881
    %vm883 = vcmp.lt.s32.totalorder %v882, 0
    %v884 = vsub.s32 0, %v882
    %v885 = vsel %vm883, %v884, %v882
    %v886 = vclz %v885
    %v887 = vsub.s32 %v886, 2
    %vm888 = vcmp.gt.s32.totalorder 0, %v887
    %v889 = vsel %vm888, 0, %v887
    %v890 = vsub.s32 32, %v889
    %v891 = vshll.u32 %v882, %v889
    %v892 = vshrl.u32 %v874, %v890
    %v893 = vor.u32 %v891, %v892
    %v894 = vsub.s32 4294967266, %v889
    %v895 = vadd.s32 %v894, 127
    %v896 = vshll.u32 %v895, 23
    %v897 = vor.u32 4788187, %v896
    %v898 = vand.u32 2147483647, %v897
    %v900 = vcvt.s32.f32 %v893
    %v901 = vmul.f32 %v900, %v898
    %v902 = vxor.u32 %v901, 2147483648
    %v903 = vsel %vm820, %v902, %v901
    %v904 = vsub.s32 4, %v880
    %v905 = vsel %vm820, %v904, %v880
    %v906 = vsel %vm819, %v419, %v903
    %v907 = vsel %vm819, 0, %v905
    %v908 = vcosq.f32.pop %v906
    %v909 = vsinq.f32.pop %v906
    %vm910 = vweird.f32 %v419
    %v911 = vadd.s32 %v907, 3
    %v912 = vand.u32 %v911, 3
    %vm913 = vcmp.lt.s32.totalorder %v912, 2
    %vm914 = vcmp.eq.s32.totalorder %v912, 0
    %v915 = vxor.u32 %v909, 2147483648
    %v916 = vsel %vm914, %v908, %v915
    %vm917 = vcmp.eq.s32.totalorder %v912, 2
    %v918 = vxor.u32 %v908, 2147483648
    %v919 = vsel %vm917, %v918, %v909
    %v920 = vsel %vm913, %v916, %v919
    %v921 = vsel %vm910, nan, %v920
    %v922 = vlaneseq
    %v923 = vshrl.u32 %v922, 7
    %v924 = vsub.s32 0, %v923
    %v925 = vrot.slane %v817, %v924
    %v926 = vmul.f32 %v925, %v702
    %v927 = vlaneseq
    %v928 = vshrl.u32 %v927, 7
    %v929 = vsub.s32 0, %v928
    %v930 = vrot.slane %v921, %v929
    %v931 = vmul.f32 %v930, %v714
    %v932 = vadd.f32 %v926, %v931
    %v933 = vlaneseq
    %v934 = vshrl.u32 %v933, 7
    %v935 = vsub.s32 0, %v934
    %v936 = vrot.slane %v80, %v935
    %v937 = vadd.f32 %v932, %v936
    %v938 = vlaneseq
    %v939 = vshrl.u32 %v938, 7
    %v940 = vsub.s32 1, %v939
    %v941 = vrot.slane %v80, %v940
    %v942 = vadd.f32 %v708, %v941
    %v943 = vsub.f32 0.0, %v921
    %v944 = vlaneseq
    %v945 = vshrl.u32 %v944, 7
    %v946 = vsub.s32 0, %v945
    %v947 = vrot.slane %v943, %v946
    %v948 = vmul.f32 %v947, %v702
    %v949 = vmul.f32 %v925, %v714
    %v950 = vadd.f32 %v948, %v949
    %v951 = vlaneseq
    %v952 = vshrl.u32 %v951, 7
    %v953 = vsub.s32 2, %v952
    %v954 = vrot.slane %v80, %v953
    %v955 = vadd.f32 %v950, %v954
    %v956 = vadd.f32 %v419, 3.1415927
    %v957 = vand.u32 2147483647, %v956
    %vm958 = vcmp.le.f32.partialorder %v957, 0.7853982
    %vm959 = vcmp.lt.s32.totalorder %v956, 0
    %v960 = vand.u32 %v956, 2139095040
    %v961 = vshrl.u32 %v960, 23
    %v962 = vsub.s32 %v961, 127
    %v963 = vand.u32 2147483647, %v956
    %v964 = vand.u32 %v963, 8388607
    %v965 = vor.u32 %v964, 8388608
    %v966 = vsub.s32 0, %v965
    %v967 = vadd.s32 %v962, 1
    %vm968 = vcmp.gt.s32.totalorder %v967, 0
    %v969 = vsel %vm968, %v967, 0
    %v970 = vshrl.u32 %v969, 5
    %v971 = vand.u32 %v969, 31
    %v972 = vsub.s32 32, %v971
    %v973 = vshrl.u32 683565275, %v972
    %v974 = vshll.u32 683565275, %v971
    %v975 = vshrl.u32 2475754826, %v972
    %v976 = vor.u32 %v974, %v975
    %v977 = vshll.u32 2475754826, %v971
    %v978 = vshrl.u32 2131351028, %v972
    %v979 = vor.u32 %v977, %v978
    %v980 = vshll.u32 2131351028, %v971
    %v981 = vshrl.u32 2102212464, %v972
    %v982 = vor.u32 %v980, %v981
    %v983 = vshll.u32 2102212464, %v971
    %v984 = vshrl.u32 920167782, %v972
    %v985 = vor.u32 %v983, %v984
    %v986 = vshll.u32 920167782, %v971
    %v987 = vshrl.u32 1326507024, %v972
    %v988 = vor.u32 %v986, %v987
    %vm989 = vcmp.lt.s32.totalorder %v970, 1
    %vm990 = vcmp.lt.s32.totalorder %v970, 2
    %vm991 = vcmp.lt.s32.totalorder %v970, 3
    %vm992 = vcmp.lt.s32.totalorder %v970, 4
    %v993 = vsel %vm989, %v973, %v976
    %v994 = vsel %vm992, %v982, 2102212464
    %v995 = vsel %vm991, %v979, %v994
    %v996 = vsel %vm990, %v993, %v995
    %v997 = vsel %vm989, %v976, %v979
    %v998 = vsel %vm992, %v985, 920167782
    %v999 = vsel %vm991, %v982, %v998
    %v1000 = vsel %vm990, %v997, %v999
    %v1001 = vsel %vm989, %v979, %v982
    %v1002 = vsel %vm992, %v988, 1326507024
    %v1003 = vsel %vm991, %v985, %v1002
    %v1004 = vsel %vm990, %v1001, %v1003
    %v1005 = vshll.u32 %v965, 8
    %v1006 = vmul.u32.u64.compose %v1005, %v1004
    %v1007 = vextract.low.u32 %v1006
    %v1008 = vextract.high.u32 %v1006
    %v1009 = vmul.u32.u64.compose %v1005, %v1000
    %v1010 = vextract.low.u32 %v1009
    %v1011 = vextract.high.u32 %v1009
    %v1012 = vmul.u32 %v1005, %v996
    %v1013 = vadd.s32 %v1008, %v1010
    %vm1014 = vc.u32 %v1008, %v1010
    %v1015 = vadd.s32 %v1011, 1
    %v1016 = vsel %vm1014, %v1015, %v1011
    %v1017 = vadd.s32 %v1012, %v1016
    %v1018 = vadd.s32 %v1017, 536870912
    %v1019 = vshrl.u32 %v1018, 30
    %v1020 = vshll.u32 %v1019, 30
    %v1021 = vsub.s32 %v1017, %v1020
    %vm1022 = vcmp.lt.s32.totalorder %v1021, 0
    %v1023 = vsub.s32 0, %v1021
    %v1024 = vsel %vm1022, %v1023, %v1021
    %v1025 = vclz %v1024
    %v1026 = vsub.s32 %v1025, 2
    %vm1027 = vcmp.gt.s32.totalorder 0, %v1026
    %v1028 = vsel %vm1027, 0, %v1026
    %v1029 = vsub.s32 32, %v1028
    %v1030 = vshll.u32 %v1021, %v1028
    %v1031 = vshrl.u32 %v1013, %v1029
    %v1032 = vor.u32 %v1030, %v1031
    %v1033 = vsub.s32 4294967266, %v1028
    %v1034 = vadd.s32 %v1033, 127
    %v1035 = vshll.u32 %v1034, 23
    %v1036 = vor.u32 4788187, %v1035
    %v1037 = vand.u32 2147483647, %v1036
    %v1039 = vcvt.s32.f32 %v1032
    %v1040 = vmul.f32 %v1039, %v1037
    %v1041 = vxor.u32 %v1040, 2147483648
    %v1042 = vsel %vm959, %v1041, %v1040
    %v1043 = vsub.s32 4, %v1019
    %v1044 = vsel %vm959, %v1043, %v1019
    %v1045 = vsel %vm958, %v956, %v1042
    %v1046 = vsel %vm958, 0, %v1044
    %v1047 = vcosq.f32.pop %v1045
    %v1048 = vsinq.f32.pop %v1045
    %vm1049 = vweird.f32 %v956
    %v1050 = vand.u32 %v1046, 3
    %vm1051 = vcmp.lt.s32.totalorder %v1050, 2
    %vm1052 = vcmp.eq.s32.totalorder %v1050, 0
    %v1053 = vxor.u32 %v1048, 2147483648
    %v1054 = vsel %vm1052, %v1047, %v1053
    %vm1055 = vcmp.eq.s32.totalorder %v1050, 2
    %v1056 = vxor.u32 %v1047, 2147483648
    %v1057 = vsel %vm1055, %v1056, %v1048
    %v1058 = vsel %vm1051, %v1054, %v1057
    %v1059 = vsel %vm1049, nan, %v1058
    %v1060 = vand.u32 2147483647, %v956
    %vm1061 = vcmp.le.f32.partialorder %v1060, 0.7853982
    %vm1062 = vcmp.lt.s32.totalorder %v956, 0
    %v1063 = vand.u32 %v956, 2139095040
    %v1064 = vshrl.u32 %v1063, 23
    %v1065 = vsub.s32 %v1064, 127
    %v1066 = vand.u32 2147483647, %v956
    %v1067 = vand.u32 %v1066, 8388607
    %v1068 = vor.u32 %v1067, 8388608
    %v1069 = vsub.s32 0, %v1068
    %v1070 = vadd.s32 %v1065, 1
    %vm1071 = vcmp.gt.s32.totalorder %v1070, 0
    %v1072 = vsel %vm1071, %v1070, 0
    %v1073 = vshrl.u32 %v1072, 5
    %v1074 = vand.u32 %v1072, 31
    %v1075 = vsub.s32 32, %v1074
    %v1076 = vshrl.u32 683565275, %v1075
    %v1077 = vshll.u32 683565275, %v1074
    %v1078 = vshrl.u32 2475754826, %v1075
    %v1079 = vor.u32 %v1077, %v1078
    %v1080 = vshll.u32 2475754826, %v1074
    %v1081 = vshrl.u32 2131351028, %v1075
    %v1082 = vor.u32 %v1080, %v1081
    %v1083 = vshll.u32 2131351028, %v1074
    %v1084 = vshrl.u32 2102212464, %v1075
    %v1085 = vor.u32 %v1083, %v1084
    %v1086 = vshll.u32 2102212464, %v1074
    %v1087 = vshrl.u32 920167782, %v1075
    %v1088 = vor.u32 %v1086, %v1087
    %v1089 = vshll.u32 920167782, %v1074
    %v1090 = vshrl.u32 1326507024, %v1075
    %v1091 = vor.u32 %v1089, %v1090
    %vm1092 = vcmp.lt.s32.totalorder %v1073, 1
    %vm1093 = vcmp.lt.s32.totalorder %v1073, 2
    %vm1094 = vcmp.lt.s32.totalorder %v1073, 3
    %vm1095 = vcmp.lt.s32.totalorder %v1073, 4
    %v1096 = vsel %vm1092, %v1076, %v1079
    %v1097 = vsel %vm1095, %v1085, 2102212464
    %v1098 = vsel %vm1094, %v1082, %v1097
    %v1099 = vsel %vm1093, %v1096, %v1098
    %v1100 = vsel %vm1092, %v1079, %v1082
    %v1101 = vsel %vm1095, %v1088, 920167782
    %v1102 = vsel %vm1094, %v1085, %v1101
    %v1103 = vsel %vm1093, %v1100, %v1102
    %v1104 = vsel %vm1092, %v1082, %v1085
    %v1105 = vsel %vm1095, %v1091, 1326507024
    %v1106 = vsel %vm1094, %v1088, %v1105
    %v1107 = vsel %vm1093, %v1104, %v1106
    %v1108 = vshll.u32 %v1068, 8
    %v1109 = vmul.u32.u64.compose %v1108, %v1107
    %v1110 = vextract.low.u32 %v1109
    %v1111 = vextract.high.u32 %v1109
    %v1112 = vmul.u32.u64.compose %v1108, %v1103
    %v1113 = vextract.low.u32 %v1112
    %v1114 = vextract.high.u32 %v1112
    %v1115 = vmul.u32 %v1108, %v1099
    %v1116 = vadd.s32 %v1111, %v1113
    %vm1117 = vc.u32 %v1111, %v1113
    %v1118 = vadd.s32 %v1114, 1
    %v1119 = vsel %vm1117, %v1118, %v1114
    %v1120 = vadd.s32 %v1115, %v1119
    %v1121 = vadd.s32 %v1120, 536870912
    %v1122 = vshrl.u32 %v1121, 30
    %v1123 = vshll.u32 %v1122, 30
    %v1124 = vsub.s32 %v1120, %v1123
    %vm1125 = vcmp.lt.s32.totalorder %v1124, 0
    %v1126 = vsub.s32 0, %v1124
    %v1127 = vsel %vm1125, %v1126, %v1124
    %v1128 = vclz %v1127
    %v1129 = vsub.s32 %v1128, 2
    %vm1130 = vcmp.gt.s32.totalorder 0, %v1129
    %v1131 = vsel %vm1130, 0, %v1129
    %v1132 = vsub.s32 32, %v1131
    %v1133 = vshll.u32 %v1124, %v1131
    %v1134 = vshrl.u32 %v1116, %v1132
    %v1135 = vor.u32 %v1133, %v1134
    %v1136 = vsub.s32 4294967266, %v1131
    %v1137 = vadd.s32 %v1136, 127
    %v1138 = vshll.u32 %v1137, 23
    %v1139 = vor.u32 4788187, %v1138
    %v1140 = vand.u32 2147483647, %v1139
    %v1142 = vcvt.s32.f32 %v1135
    %v1143 = vmul.f32 %v1142, %v1140
    %v1144 = vxor.u32 %v1143, 2147483648
    %v1145 = vsel %vm1062, %v1144, %v1143
    %v1146 = vsub.s32 4, %v1122
    %v1147 = vsel %vm1062, %v1146, %v1122
    %v1148 = vsel %vm1061, %v956, %v1145
    %v1149 = vsel %vm1061, 0, %v1147
    %v1150 = vcosq.f32.pop %v1148
    %v1151 = vsinq.f32.pop %v1148
    %vm1152 = vweird.f32 %v956
    %v1153 = vadd.s32 %v1149, 3
    %v1154 = vand.u32 %v1153, 3
    %vm1155 = vcmp.lt.s32.totalorder %v1154, 2
    %vm1156 = vcmp.eq.s32.totalorder %v1154, 0
    %v1157 = vxor.u32 %v1151, 2147483648
    %v1158 = vsel %vm1156, %v1150, %v1157
    %vm1159 = vcmp.eq.s32.totalorder %v1154, 2
    %v1160 = vxor.u32 %v1150, 2147483648
    %v1161 = vsel %vm1159, %v1160, %v1151
    %v1162 = vsel %vm1155, %v1158, %v1161
    %v1163 = vsel %vm1152, nan, %v1162
    %v1164 = vlaneseq
    %v1165 = vshrl.u32 %v1164, 7
    %v1166 = vsub.s32 0, %v1165
    %v1167 = vrot.slane %v1059, %v1166
    %v1168 = vmul.f32 %v1167, %v702
    %v1169 = vlaneseq
    %v1170 = vshrl.u32 %v1169, 7
    %v1171 = vsub.s32 0, %v1170
    %v1172 = vrot.slane %v1163, %v1171
    %v1173 = vmul.f32 %v1172, %v714
    %v1174 = vadd.f32 %v1168, %v1173
    %v1175 = vadd.f32 %v1174, %v936
    %v1176 = vsub.f32 0.0, %v1163
    %v1177 = vlaneseq
    %v1178 = vshrl.u32 %v1177, 7
    %v1179 = vsub.s32 0, %v1178
    %v1180 = vrot.slane %v1176, %v1179
    %v1181 = vmul.f32 %v1180, %v702
    %v1182 = vmul.f32 %v1167, %v714
    %v1183 = vadd.f32 %v1181, %v1182
    %v1184 = vadd.f32 %v1183, %v954
    %v1185 = vsub.f32 %v682, %v937
    %v1186 = vand.u32 2147483647, %v1185
    %v1187 = vsub.f32 %v687, %v942
    %v1188 = vand.u32 2147483647, %v1187
    %v1189 = vadd.f32 %v1186, %v1188
    %v1190 = vsub.f32 %v696, %v955
    %v1191 = vand.u32 2147483647, %v1190
    %v1192 = vadd.f32 %v1189, %v1191
    %v1193 = vsub.f32 %v682, %v1175
    %v1194 = vand.u32 2147483647, %v1193
    %v1195 = vadd.f32 %v1194, %v1188
    %v1196 = vsub.f32 %v696, %v1184
    %v1197 = vand.u32 2147483647, %v1196
    %v1198 = vadd.f32 %v1195, %v1197
    %v1199 = vmin.f32 %v1192, %v1198
    %v1200 = vand.u32 2147483647, %v1199
    %v1201 = vmin.f32 %v1200, 1.0
    %v1202 = vmul.f32 %v1201, 0.5
    %v1203 = vmul.f32 %v1202, %v1201
    %v1204 = vsub.f32 %v1200, %v1201
    %v1205 = vadd.f32 %v1203, %v1204
    %v1206 = vmul.f32 %v1205, %v25
    %v1207 = vsel %vm154, %v1206, 0.0
    %1208 = vadd.xlane.f32.xlu0 %v1207
    %v1209 = vpop.xlane.xlu0 %1208
    %v1210 = vrot.slane %v1209, 4
    %v1211 = vadd.f32 %v1209, %v1210
    %v1212 = vrot.slane %v1211, 2
    %v1213 = vadd.f32 %v1211, %v1212
    %v1214 = vrot.slane %v1213, 1
    %v1215 = vadd.f32 %v1213, %v1214
    %s1216 = vtos %v1215
    %vm1217 = vcmp.eq.s32.totalorder %v27, 0
    %v1218 = vstv %s79
    %v1219 = vsel %vm1217, %v1218, 0.0
    %vm1220 = vcmp.eq.s32.totalorder %v27, 1
    %v1221 = vstv %s111
    %v1222 = vsel %vm1220, %v1221, 0.0
    %v1223 = vadd.f32 %v1219, %v1222
    %vm1224 = vcmp.eq.s32.totalorder %v27, 2
    %v1225 = vstv %s137
    %v1226 = vsel %vm1224, %v1225, 0.0
    %v1227 = vadd.f32 %v1223, %v1226
    %vm1228 = vcmp.eq.s32.totalorder %v27, 3
    %v1229 = vstv %s205
    %v1230 = vsel %vm1228, %v1229, 0.0
    %v1231 = vadd.f32 %v1227, %v1230
    %vm1232 = vcmp.eq.s32.totalorder %v27, 4
    %v1233 = vstv %s238
    %v1234 = vsel %vm1232, %v1233, 0.0
    %v1235 = vadd.f32 %v1231, %v1234
    %vm1236 = vcmp.eq.s32.totalorder %v27, 5
    %v1237 = vstv %s287
    %v1238 = vsel %vm1236, %v1237, 0.0
    %v1239 = vadd.f32 %v1235, %v1238
    %vm1240 = vcmp.eq.s32.totalorder %v27, 6
    %v1241 = vstv %s390
    %v1242 = vsel %vm1240, %v1241, 0.0
    %v1243 = vadd.f32 %v1239, %v1242
    %vm1244 = vcmp.eq.s32.totalorder %v27, 7
    %v1245 = vstv %s1216
    %v1246 = vsel %vm1244, %v1245, 0.0
    %v1247 = vadd.f32 %v1243, %v1246
    %1248 = vst [vmem:[#allocation2] sm:$0xff] %v1247
    // Predicated region
    $region18: #{tpu_custom_call.1} parent=1 // pred_check
      _
    $region19: #{tpu_custom_call.1} parent=1 // pred_check_branch
      %1250 = sbr.rel (0) target = $region21
    $region20: #{tpu_custom_call.1} parent=1 // pred_region
      %s1252 = ssub.s32 128, 128
      %1253 = vsyncadd [#allocation3], %s1252
      %s1255 = sshll.u32 [#allocation2], 4
      %s1256 = int_to_ptr.vmem [resolvable:$true] %s1255
      %1258 = dma.vmem_to_hbm [thread:$0]  %s1256, 128, %s4, [#allocation3]
    $region21: #{tpu_custom_call.1} parent=1 // pred_fallthru
      _
    // Predicated region
    $region22: #{tpu_custom_call.1} parent=1 // pred_check
      _
    $region23: #{tpu_custom_call.1} parent=1 // pred_check_branch
      %1260 = sbr.rel (0) target = $region25
    $region24: #{tpu_custom_call.1} parent=1 // pred_region
      %1261 = dma.done [#allocation3], 128
    $region25: #{tpu_custom_call.1} parent=1 // pred_fallthru
      _
    %1262 = vsyncpa [#allocation3], 1

</llo_original>
